<compile_context>
chip_gen: v5e
topology: v5e:2x2
jax: 0.10.0
libtpu: 0.0.40
codegen_flags: <defaults>
</compile_context>

<pallas_src>
import functools

import jax
import jax.numpy as jnp
from jax import lax
from jax.experimental import pallas as pl
from jax.experimental.pallas import tpu as pltpu


def _dense_layer_kernel(x_ref, xt_ref, xb_ref, s1_ref, b1_ref, w1_ref,
                        b2_ref, w2_ref, out_ref, *, img_h):
    # x_ref  : (TH, W, Cin)       bf16  current row tile
    # xt_ref : (W, Cin)           bf16  halo row above  (clamped at image top)
    # xb_ref : (W, Cin)           bf16  halo row below  (clamped at image bottom)
    # s1_ref : (1, Cin)           f32   folded BN1 scale
    # b1_ref : (1, Cin)           f32   folded BN1 bias
    # w1_ref : (Cin, Cmid)        bf16  1x1 conv weight with BN2 scale folded in
    # b2_ref : (1, Cmid)          f32   folded BN2 bias
    # w2_ref : (3, 3*Cmid, Cout)  bf16  3x3 weight; rows of each ky block = (kx, c)
    # out_ref: (TH, W, Cout)      bf16
    TH, W, Cin = x_ref.shape
    Cmid = w1_ref.shape[1]
    Cout = w2_ref.shape[-1]

    t_idx = pl.program_id(1)

    # --- assemble TH+2 rows: halo above, body, halo below (axis-0 concat, cheap) ---
    x_all = jnp.concatenate(
        [xt_ref[...].reshape(1, W, Cin), x_ref[...], xb_ref[...].reshape(1, W, Cin)],
        axis=0)                                                     # (TH+2, W, Cin)

    # --- BN1 + ReLU (f32 on the VPU; input arrives as bf16) ---
    xf = x_all.astype(jnp.float32).reshape((TH + 2) * W, Cin)
    t = jnp.maximum(xf * s1_ref[...] + b1_ref[...], 0.0)

    # --- 1x1 conv (BN2 scale pre-folded into w1): bf16 MXU operands, f32 acc ---
    z = jnp.dot(t.astype(jnp.bfloat16), w1_ref[...],
                preferred_element_type=jnp.float32)                 # ((TH+2)*W, Cmid)

    # --- BN2 bias + ReLU (f32 on the VPU) ---
    u = jnp.maximum(z + b2_ref[...], 0.0).reshape(TH + 2, W, Cmid)

    # Zero rows outside the real image: conv2 zero-padding along H and any rows
    # added by the cdiv row-tiling (global-row mask, so uneven H is fine).
    row = lax.broadcasted_iota(jnp.int32, (TH + 2, 1, 1), 0)
    grow = t_idx * TH + row - 1                 # global image row of each local row
    u = jnp.where(jnp.logical_or(grow < 0, grow >= img_h), 0.0, u)

    # --- dx = -1 / +1 taps via XLU roll along W + boundary masks (zero-pad in W) ---
    col = lax.broadcasted_iota(jnp.int32, (1, W, 1), 1)
    u_m1 = jnp.where(col == 0, 0.0, pltpu.roll(u, 1, axis=1))           # u[:, w-1, :]
    u_p1 = jnp.where(col == W - 1, 0.0, pltpu.roll(u, W - 1, axis=1))   # u[:, w+1, :]

    # One lane-axis concat of the 3 dx taps; then 3 accumulated MXU matmuls over
    # ky (K = 3*Cmid each) instead of materializing a 9x-duplicated im2col lhs.
    u3 = jnp.concatenate([u_m1, u, u_p1], axis=-1).astype(jnp.bfloat16)  # (TH+2, W, 3*Cmid)

    lhs0 = u3[0:TH].reshape(TH * W, 3 * Cmid)
    acc = jnp.dot(lhs0, w2_ref[0], preferred_element_type=jnp.float32)   # (TH*W, Cout)
    for ky in (1, 2):  # static, unrolled
        lhs = u3[ky:ky + TH].reshape(TH * W, 3 * Cmid)
        acc = acc + jnp.dot(lhs, w2_ref[ky], preferred_element_type=jnp.float32)

    # Store only the real Cout channels, in bf16 (no 128-lane padded slab).
    out_ref[...] = acc.reshape(TH, W, Cout).astype(out_ref.dtype)


@functools.partial(jax.jit, static_argnames=("tile_h",))
def dense_layer_forward(x_nchw, s1, b1, w1, s2, b2, w2, *, tile_h=None):
    """x_nchw: (N, Cin, H, W) f32.  Returns new_features: (N, Cout, H, W) bf16."""
    N, Cin, H, W = x_nchw.shape
    Cmid = w1.shape[1]
    Cout = w2.shape[-1]

    # Per-chip tile height / VMEM budget (v7x: 64 MiB VMEM, v5e/v6e: 128 MiB).
    try:
        vmem_cap = int(pltpu.get_tpu_info().vmem_capacity_bytes)
    except Exception:  # conservative fallback (assume v7x-sized VMEM)
        vmem_cap = 64 * 1024 * 1024
    if vmem_cap <= 0:
        vmem_cap = 64 * 1024 * 1024
    if tile_h is None:
        tile_h = 64 if vmem_cap >= 128 * 1024 * 1024 else 32
    vmem_limit = int(max(32 * 1024 * 1024,
                         min(96 * 1024 * 1024, (vmem_cap * 3) // 4)))

    # cdiv row tiling: whole image in one tile, or a multiple-of-8 tile height
    # with H padded up (padded rows are masked in-kernel and sliced off below).
    if H <= tile_h:
        th, Hp = H, H
    else:
        th = max(8, (tile_h // 8) * 8)
        Hp = pl.cdiv(H, th) * th
    n_tiles = Hp // th

    # NCHW -> NHWC in bf16 (half the HBM traffic of an f32 path); channels on lanes.
    x_nhwc = jnp.transpose(x_nchw.astype(jnp.bfloat16), (0, 2, 3, 1))
    if Hp != H:
        x_nhwc = jnp.pad(x_nhwc, ((0, 0), (0, Hp - H), (0, 0), (0, 0)))

    # Fold BN2 scale into the 1x1 weight; pack the 3x3 weight as 3 row-blocks
    # (ky, (kx, c), o) so the kernel runs 3 accumulated K=3*Cmid matmuls.
    w1f = (w1 * s2[None, :]).astype(jnp.bfloat16)
    w2m = w2.reshape(3, 3 * Cmid, Cout).astype(jnp.bfloat16)
    s1r = s1.reshape(1, Cin).astype(jnp.float32)
    b1r = b1.reshape(1, Cin).astype(jnp.float32)
    b2r = b2.reshape(1, Cmid).astype(jnp.float32)

    flops = 2 * N * Hp * W * Cmid * (Cin + 9 * Cout)
    bytes_accessed = (N * n_tiles * (th + 2) * W * Cin * 2      # bf16 input + halos
                      + N * Hp * W * Cout * 2                   # bf16 output
                      + (Cin * Cmid + 9 * Cmid * Cout) * 2      # bf16 weights
                      + (2 * Cin + Cmid) * 4)                   # f32 BN params

    kernel = functools.partial(_dense_layer_kernel, img_h=H)

    out = pl.pallas_call(
        kernel,
        out_shape=jax.ShapeDtypeStruct((N, Hp, W, Cout), jnp.bfloat16),
        grid=(N, n_tiles),
        in_specs=[
            # current row tile of x
            pl.BlockSpec((None, th, W, Cin), lambda n, t: (n, t, 0, 0)),
            # halo row above / below (clamped; masked in-kernel via global row idx)
            pl.BlockSpec((None, None, W, Cin),
                         lambda n, t: (n, jnp.maximum(t * th - 1, 0), 0, 0)),
            pl.BlockSpec((None, None, W, Cin),
                         lambda n, t: (n, jnp.minimum(t * th + th, Hp - 1), 0, 0)),
            # small per-channel params / weights (constant blocks)
            pl.BlockSpec((1, Cin), lambda n, t: (0, 0)),
            pl.BlockSpec((1, Cin), lambda n, t: (0, 0)),
            pl.BlockSpec((Cin, Cmid), lambda n, t: (0, 0)),
            pl.BlockSpec((1, Cmid), lambda n, t: (0, 0)),
            pl.BlockSpec((3, 3 * Cmid, Cout), lambda n, t: (0, 0, 0)),
        ],
        out_specs=pl.BlockSpec((None, th, W, Cout), lambda n, t: (n, t, 0, 0)),
        compiler_params=pltpu.CompilerParams(
            dimension_semantics=("parallel", "parallel"),
            vmem_limit_bytes=vmem_limit,
        ),
        cost_estimate=pl.CostEstimate(flops=int(flops), transcendentals=0,
                                      bytes_accessed=int(bytes_accessed)),
    )(x_nhwc, x_nhwc, x_nhwc, s1r, b1r, w1f, b2r, w2m)

    # Drop any H padding and go back to NCHW (bf16, real Cout only — no slab slice).
    out = out[:, :H]
    return jnp.transpose(out, (0, 3, 1, 2))


def _fold_bn(gamma, beta, running_mean, running_var, eps=1e-5):
    scale = gamma / jnp.sqrt(running_var + eps)
    bias = beta - running_mean * scale
    return scale, bias


def _reference(x_nchw, s1, b1, w1, s2, b2, w2):
    """Pure-JAX reference of the same decomposition (bf16 I/O + MXU operands, f32 math)."""
    x = jnp.transpose(x_nchw, (0, 2, 3, 1)).astype(jnp.bfloat16).astype(jnp.float32)
    N, H, W, Cin = x.shape
    Cout = w2.shape[-1]
    t = jnp.maximum(x * s1 + b1, 0.0)
    w1f = (w1 * s2[None, :]).astype(jnp.bfloat16)
    z = jnp.einsum('nhwc,cd->nhwd', t.astype(jnp.bfloat16), w1f,
                   preferred_element_type=jnp.float32)
    u = jnp.maximum(z + b2, 0.0)
    up = jnp.pad(u, ((0, 0), (1, 1), (1, 1), (0, 0))).astype(jnp.bfloat16)
    w2b = w2.astype(jnp.bfloat16)
    out = jnp.zeros((N, H, W, Cout), jnp.float32)
    for dy in range(3):
        for dx in range(3):
            out = out + jnp.einsum('nhwc,co->nhwo',
                                   up[:, dy:dy + H, dx:dx + W, :], w2b[dy, dx],
                                   preferred_element_type=jnp.float32)
    return jnp.transpose(out.astype(jnp.bfloat16), (0, 3, 1, 2))


if __name__ == "__main__":
    # _DenseLayer(num_input_features=4, growth_rate=8, bn_size=4, drop_rate=0.0)
    num_input_features = 4
    growth_rate = 8
    bn_size = 4
    Cin = num_input_features
    Cmid = bn_size * growth_rate      # 32
    Cout = growth_rate                # 8
    N, H, W = 2, 16, 16

    key = jax.random.PRNGKey(0)
    keys = jax.random.split(key, 12)

    # Input (NCHW, like PyTorch)
    x = jax.random.normal(keys[0], (N, Cin, H, W), jnp.float32)

    # BatchNorm1 params / running stats (eval mode)
    g1 = jax.random.normal(keys[1], (Cin,), jnp.float32) * 0.1 + 1.0
    be1 = jax.random.normal(keys[2], (Cin,), jnp.float32) * 0.1
    rm1 = jax.random.normal(keys[3], (Cin,), jnp.float32) * 0.1
    rv1 = jnp.abs(jax.random.normal(keys[4], (Cin,), jnp.float32)) * 0.1 + 0.9

    # conv1: PyTorch weight (Cmid, Cin, 1, 1) -> our (Cin, Cmid)
    w1 = jax.random.normal(keys[5], (Cin, Cmid), jnp.float32) * 0.1

    # BatchNorm2 params / running stats
    g2 = jax.random.normal(keys[6], (Cmid,), jnp.float32) * 0.1 + 1.0
    be2 = jax.random.normal(keys[7], (Cmid,), jnp.float32) * 0.1
    rm2 = jax.random.normal(keys[8], (Cmid,), jnp.float32) * 0.1
    rv2 = jnp.abs(jax.random.normal(keys[9], (Cmid,), jnp.float32)) * 0.1 + 0.9

    # conv2: PyTorch weight (Cout, Cmid, 3, 3) -> our HWIO (3, 3, Cmid, Cout)
    w2 = jax.random.normal(keys[10], (3, 3, Cmid, Cout), jnp.float32) * 0.1

    s1, b1 = _fold_bn(g1, be1, rm1, rv1)
    s2, b2 = _fold_bn(g2, be2, rm2, rv2)

    out = jax.block_until_ready(dense_layer_forward(x, s1, b1, w1, s2, b2, w2))
    ref = jax.block_until_ready(_reference(x, s1, b1, w1, s2, b2, w2))

    assert out.shape == (N, Cout, H, W), out.shape
    assert out.dtype == jnp.bfloat16, out.dtype
    out_f = out.astype(jnp.float32)
    ref_f = ref.astype(jnp.float32)
    max_err = float(jnp.max(jnp.abs(out_f - ref_f)))
    assert jnp.allclose(out_f, ref_f, rtol=2e-2, atol=2e-2), max_err

    print("KERNEL_OK")
</pallas_src>

<mosaic_0001>
module attributes {stable_mosaic.version = 11 : i64} {
  func.func @_dense_layer_kernel(%arg0: i32, %arg1: i32, %arg2: memref<1x16x16x4xbf16, #tpu.memory_space<vmem>>, %arg3: memref<1x1x16x4xbf16, #tpu.memory_space<vmem>>, %arg4: memref<1x1x16x4xbf16, #tpu.memory_space<vmem>>, %arg5: memref<1x4xf32, #tpu.memory_space<vmem>>, %arg6: memref<1x4xf32, #tpu.memory_space<vmem>>, %arg7: memref<4x32xbf16, #tpu.memory_space<vmem>>, %arg8: memref<1x32xf32, #tpu.memory_space<vmem>>, %arg9: memref<3x96x8xbf16, #tpu.memory_space<vmem>>, %arg10: memref<1x16x16x8xbf16, #tpu.memory_space<vmem>>) attributes {dimension_semantics = [#tpu.dimension_semantics<parallel>, #tpu.dimension_semantics<parallel>], iteration_bounds = array<i64: 2, 1>, scalar_prefetch = 0 : i64, scratch_operands = 0 : i64, tpu.core_type = #tpu.core_type<tc>, window_params = [{transform_indices = @transform_0, window_bounds = array<i64: 1, 16, 16, 4>}, {transform_indices = @transform_1, window_bounds = array<i64: 1, 1, 16, 4>}, {transform_indices = @transform_2, window_bounds = array<i64: 1, 1, 16, 4>}, {pipeline_mode = #tpu.pipeline_mode<synchronous>, transform_indices = @transform_3, window_bounds = array<i64: 1, 4>}, {pipeline_mode = #tpu.pipeline_mode<synchronous>, transform_indices = @transform_4, window_bounds = array<i64: 1, 4>}, {pipeline_mode = #tpu.pipeline_mode<synchronous>, transform_indices = @transform_5, window_bounds = array<i64: 4, 32>}, {pipeline_mode = #tpu.pipeline_mode<synchronous>, transform_indices = @transform_6, window_bounds = array<i64: 1, 32>}, {pipeline_mode = #tpu.pipeline_mode<synchronous>, transform_indices = @transform_7, window_bounds = array<i64: 3, 96, 8>}, {transform_indices = @transform_8, window_bounds = array<i64: 1, 16, 16, 8>}]} {
    %c0 = arith.constant 0 : index
    %c0_0 = arith.constant 0 : index
    %c0_1 = arith.constant 0 : index
    %c0_2 = arith.constant 0 : index
    %0 = vector.load %arg3[%c0, %c0_0, %c0_1, %c0_2] : memref<1x1x16x4xbf16, #tpu.memory_space<vmem>>, vector<1x1x16x4xbf16>
    %1 = vector.shape_cast %0 : vector<1x1x16x4xbf16> to vector<16x4xbf16>
    %2 = vector.shape_cast %1 : vector<16x4xbf16> to vector<1x16x4xbf16>
    %c0_3 = arith.constant 0 : index
    %c0_4 = arith.constant 0 : index
    %c0_5 = arith.constant 0 : index
    %c0_6 = arith.constant 0 : index
    %3 = vector.load %arg2[%c0_3, %c0_4, %c0_5, %c0_6] : memref<1x16x16x4xbf16, #tpu.memory_space<vmem>>, vector<1x16x16x4xbf16>
    %4 = vector.shape_cast %3 : vector<1x16x16x4xbf16> to vector<16x16x4xbf16>
    %c0_7 = arith.constant 0 : index
    %c0_8 = arith.constant 0 : index
    %c0_9 = arith.constant 0 : index
    %c0_10 = arith.constant 0 : index
    %5 = vector.load %arg4[%c0_7, %c0_8, %c0_9, %c0_10] : memref<1x1x16x4xbf16, #tpu.memory_space<vmem>>, vector<1x1x16x4xbf16>
    %6 = vector.shape_cast %5 : vector<1x1x16x4xbf16> to vector<16x4xbf16>
    %7 = vector.shape_cast %6 : vector<16x4xbf16> to vector<1x16x4xbf16>
    %8 = tpu.concatenate %2, %4, %7 in 0 : vector<1x16x4xbf16>, vector<16x16x4xbf16>, vector<1x16x4xbf16> -> vector<18x16x4xbf16>
    %9 = arith.extf %8 : vector<18x16x4xbf16> to vector<18x16x4xf32>
    %10 = vector.shape_cast %9 : vector<18x16x4xf32> to vector<288x4xf32>
    %c0_11 = arith.constant 0 : index
    %c0_12 = arith.constant 0 : index
    %11 = vector.load %arg5[%c0_11, %c0_12] : memref<1x4xf32, #tpu.memory_space<vmem>>, vector<1x4xf32>
    %12 = vector.broadcast %11 : vector<1x4xf32> to vector<288x4xf32>
    %13 = arith.mulf %10, %12 : vector<288x4xf32>
    %c0_13 = arith.constant 0 : index
    %c0_14 = arith.constant 0 : index
    %14 = vector.load %arg6[%c0_13, %c0_14] : memref<1x4xf32, #tpu.memory_space<vmem>>, vector<1x4xf32>
    %15 = vector.broadcast %14 : vector<1x4xf32> to vector<288x4xf32>
    %16 = arith.addf %13, %15 : vector<288x4xf32>
    %cst = arith.constant 0.000000e+00 : f32
    %17 = vector.broadcast %cst : f32 to vector<288x4xf32>
    %18 = arith.maximumf %16, %17 : vector<288x4xf32>
    %19 = arith.truncf %18 : vector<288x4xf32> to vector<288x4xbf16>
    %c0_15 = arith.constant 0 : index
    %c0_16 = arith.constant 0 : index
    %20 = vector.load %arg7[%c0_15, %c0_16] : memref<4x32xbf16, #tpu.memory_space<vmem>>, vector<4x32xbf16>
    %cst_17 = arith.constant dense<0.000000e+00> : vector<288x32xf32>
    %21 = tpu.matmul %19, %20, %cst_17 {dimension_numbers = #tpu.dot_dimension_numbers<[1], [0], [0], [1], [0, 0, 1, 1], [], []>} : vector<288x4xbf16>, vector<4x32xbf16>, vector<288x32xf32> -> vector<288x32xf32>
    %c0_18 = arith.constant 0 : index
    %c0_19 = arith.constant 0 : index
    %22 = vector.load %arg8[%c0_18, %c0_19] : memref<1x32xf32, #tpu.memory_space<vmem>>, vector<1x32xf32>
    %23 = vector.broadcast %22 : vector<1x32xf32> to vector<288x32xf32>
    %24 = arith.addf %21, %23 : vector<288x32xf32>
    %cst_20 = arith.constant 0.000000e+00 : f32
    %25 = vector.broadcast %cst_20 : f32 to vector<288x32xf32>
    %26 = arith.maximumf %24, %25 : vector<288x32xf32>
    %27 = vector.shape_cast %26 : vector<288x32xf32> to vector<18x16x32xf32>
    %28 = tpu.iota {dimensions = array<i32: 0>} : vector<18x1x1xi32>
    %c16_i32 = arith.constant 16 : i32
    %29 = arith.muli %arg1, %c16_i32 : i32
    %30 = vector.broadcast %29 : i32 to vector<18x1x1xi32>
    %31 = arith.addi %30, %28 : vector<18x1x1xi32>
    %c1_i32 = arith.constant 1 : i32
    %32 = vector.broadcast %c1_i32 : i32 to vector<18x1x1xi32>
    %33 = arith.subi %31, %32 : vector<18x1x1xi32>
    %c0_i32 = arith.constant 0 : i32
    %34 = vector.broadcast %c0_i32 : i32 to vector<18x1x1xi32>
    %35 = arith.cmpi slt, %33, %34 : vector<18x1x1xi32>
    %c16_i32_21 = arith.constant 16 : i32
    %36 = vector.broadcast %c16_i32_21 : i32 to vector<18x1x1xi32>
    %37 = arith.cmpi sge, %33, %36 : vector<18x1x1xi32>
    %38 = arith.ori %35, %37 : vector<18x1x1xi1>
    %cst_22 = arith.constant 0.000000e+00 : f32
    %39 = vector.shape_cast %38 : vector<18x1x1xi1> to vector<18x1x1xi1>
    %40 = vector.broadcast %39 : vector<18x1x1xi1> to vector<18x16x32xi1>
    %41 = vector.broadcast %cst_22 : f32 to vector<18x16x32xf32>
    %42 = arith.select %40, %41, %27 : vector<18x16x32xi1>, vector<18x16x32xf32>
    %43 = tpu.iota {dimensions = array<i32: 1>} : vector<1x16x1xi32>
    %c0_i32_23 = arith.constant 0 : i32
    %44 = vector.broadcast %c0_i32_23 : i32 to vector<1x16x1xi32>
    %45 = arith.cmpi eq, %43, %44 : vector<1x16x1xi32>
    %c1_i32_24 = arith.constant 1 : i32
    %46 = tpu.dynamic_rotate %42 by %c1_i32_24 dim 1 : vector<18x16x32xf32>, i32 -> vector<18x16x32xf32>
    %cst_25 = arith.constant 0.000000e+00 : f32
    %47 = vector.shape_cast %45 : vector<1x16x1xi1> to vector<1x16x1xi1>
    %48 = vector.broadcast %47 : vector<1x16x1xi1> to vector<18x16x32xi1>
    %49 = vector.broadcast %cst_25 : f32 to vector<18x16x32xf32>
    %50 = arith.select %48, %49, %46 : vector<18x16x32xi1>, vector<18x16x32xf32>
    %c15_i32 = arith.constant 15 : i32
    %51 = vector.broadcast %c15_i32 : i32 to vector<1x16x1xi32>
    %52 = arith.cmpi eq, %43, %51 : vector<1x16x1xi32>
    %c15_i32_26 = arith.constant 15 : i32
    %53 = tpu.dynamic_rotate %42 by %c15_i32_26 dim 1 : vector<18x16x32xf32>, i32 -> vector<18x16x32xf32>
    %cst_27 = arith.constant 0.000000e+00 : f32
    %54 = vector.shape_cast %52 : vector<1x16x1xi1> to vector<1x16x1xi1>
    %55 = vector.broadcast %54 : vector<1x16x1xi1> to vector<18x16x32xi1>
    %56 = vector.broadcast %cst_27 : f32 to vector<18x16x32xf32>
    %57 = arith.select %55, %56, %53 : vector<18x16x32xi1>, vector<18x16x32xf32>
    %58 = tpu.concatenate %50, %42, %57 in 2 : vector<18x16x32xf32>, vector<18x16x32xf32>, vector<18x16x32xf32> -> vector<18x16x96xf32>
    %59 = arith.truncf %58 : vector<18x16x96xf32> to vector<18x16x96xbf16>
    %60 = vector.extract_strided_slice %59 {offsets = [0, 0, 0], sizes = [16, 16, 96], strides = [1, 1, 1]} : vector<18x16x96xbf16> to vector<16x16x96xbf16>
    %61 = vector.shape_cast %60 : vector<16x16x96xbf16> to vector<256x96xbf16>
    %c0_28 = arith.constant 0 : index
    %c0_29 = arith.constant 0 : index
    %c0_30 = arith.constant 0 : index
    %62 = vector.load %arg9[%c0_28, %c0_29, %c0_30] : memref<3x96x8xbf16, #tpu.memory_space<vmem>>, vector<1x96x8xbf16>
    %63 = vector.shape_cast %62 : vector<1x96x8xbf16> to vector<96x8xbf16>
    %cst_31 = arith.constant dense<0.000000e+00> : vector<256x8xf32>
    %64 = tpu.matmul %61, %63, %cst_31 {dimension_numbers = #tpu.dot_dimension_numbers<[1], [0], [0], [1], [0, 0, 1, 1], [], []>} : vector<256x96xbf16>, vector<96x8xbf16>, vector<256x8xf32> -> vector<256x8xf32>
    %65 = vector.extract_strided_slice %59 {offsets = [1, 0, 0], sizes = [16, 16, 96], strides = [1, 1, 1]} : vector<18x16x96xbf16> to vector<16x16x96xbf16>
    %66 = vector.shape_cast %65 : vector<16x16x96xbf16> to vector<256x96xbf16>
    %c1 = arith.constant 1 : index
    %c0_32 = arith.constant 0 : index
    %c0_33 = arith.constant 0 : index
    %67 = vector.load %arg9[%c1, %c0_32, %c0_33] : memref<3x96x8xbf16, #tpu.memory_space<vmem>>, vector<1x96x8xbf16>
    %68 = vector.shape_cast %67 : vector<1x96x8xbf16> to vector<96x8xbf16>
    %cst_34 = arith.constant dense<0.000000e+00> : vector<256x8xf32>
    %69 = tpu.matmul %66, %68, %cst_34 {dimension_numbers = #tpu.dot_dimension_numbers<[1], [0], [0], [1], [0, 0, 1, 1], [], []>} : vector<256x96xbf16>, vector<96x8xbf16>, vector<256x8xf32> -> vector<256x8xf32>
    %70 = arith.addf %64, %69 : vector<256x8xf32>
    %71 = vector.extract_strided_slice %59 {offsets = [2, 0, 0], sizes = [16, 16, 96], strides = [1, 1, 1]} : vector<18x16x96xbf16> to vector<16x16x96xbf16>
    %72 = vector.shape_cast %71 : vector<16x16x96xbf16> to vector<256x96xbf16>
    %c2 = arith.constant 2 : index
    %c0_35 = arith.constant 0 : index
    %c0_36 = arith.constant 0 : index
    %73 = vector.load %arg9[%c2, %c0_35, %c0_36] : memref<3x96x8xbf16, #tpu.memory_space<vmem>>, vector<1x96x8xbf16>
    %74 = vector.shape_cast %73 : vector<1x96x8xbf16> to vector<96x8xbf16>
    %cst_37 = arith.constant dense<0.000000e+00> : vector<256x8xf32>
    %75 = tpu.matmul %72, %74, %cst_37 {dimension_numbers = #tpu.dot_dimension_numbers<[1], [0], [0], [1], [0, 0, 1, 1], [], []>} : vector<256x96xbf16>, vector<96x8xbf16>, vector<256x8xf32> -> vector<256x8xf32>
    %76 = arith.addf %70, %75 : vector<256x8xf32>
    %77 = vector.shape_cast %76 : vector<256x8xf32> to vector<16x16x8xf32>
    %78 = arith.truncf %77 : vector<16x16x8xf32> to vector<16x16x8xbf16>
    %c0_38 = arith.constant 0 : index
    %c0_39 = arith.constant 0 : index
    %c0_40 = arith.constant 0 : index
    %c0_41 = arith.constant 0 : index
    %79 = vector.load %arg10[%c0_38, %c0_39, %c0_40, %c0_41] : memref<1x16x16x8xbf16, #tpu.memory_space<vmem>>, vector<1x16x16x8xbf16>
    %80 = vector.shape_cast %79 : vector<1x16x16x8xbf16> to vector<16x16x8xbf16>
    %81 = vector.shape_cast %78 : vector<16x16x8xbf16> to vector<1x16x16x8xbf16>
    tpu.vector_store %arg10[%c0_38, %c0_39, %c0_40, %c0_41], %81 {strides = array<i32>} : memref<1x16x16x8xbf16, #tpu.memory_space<vmem>>, vector<1x16x16x8xbf16>,
    return
  }
  func.func @transform_0(%arg0: i32, %arg1: i32) -> (i32, i32, i32, i32) {
    %c0_i32 = arith.constant 0 : i32
    %c0_i32_0 = arith.constant 0 : i32
    %c0_i32_1 = arith.constant 0 : i32
    return %arg0, %arg1, %c0_i32, %c0_i32_0 : i32, i32, i32, i32
  }
  func.func @transform_1(%arg0: i32, %arg1: i32) -> (i32, i32, i32, i32) {
    %c16_i32 = arith.constant 16 : i32
    %0 = arith.muli %arg1, %c16_i32 : i32
    %c1_i32 = arith.constant 1 : i32
    %1 = arith.subi %0, %c1_i32 : i32
    %c0_i32 = arith.constant 0 : i32
    %2 = arith.maxsi %1, %c0_i32 : i32
    %c0_i32_0 = arith.constant 0 : i32
    %c0_i32_1 = arith.constant 0 : i32
    %c0_i32_2 = arith.constant 0 : i32
    return %arg0, %2, %c0_i32_0, %c0_i32_1 : i32, i32, i32, i32
  }
  func.func @transform_2(%arg0: i32, %arg1: i32) -> (i32, i32, i32, i32) {
    %c16_i32 = arith.constant 16 : i32
    %0 = arith.muli %arg1, %c16_i32 : i32
    %c16_i32_0 = arith.constant 16 : i32
    %1 = arith.addi %0, %c16_i32_0 : i32
    %c15_i32 = arith.constant 15 : i32
    %2 = arith.minsi %1, %c15_i32 : i32
    %c0_i32 = arith.constant 0 : i32
    %c0_i32_1 = arith.constant 0 : i32
    %c0_i32_2 = arith.constant 0 : i32
    return %arg0, %2, %c0_i32, %c0_i32_1 : i32, i32, i32, i32
  }
  func.func @transform_3(%arg0: i32, %arg1: i32) -> (i32, i32) {
    %c0_i32 = arith.constant 0 : i32
    %c0_i32_0 = arith.constant 0 : i32
    %c0_i32_1 = arith.constant 0 : i32
    return %c0_i32, %c0_i32_0 : i32, i32
  }
  func.func @transform_4(%arg0: i32, %arg1: i32) -> (i32, i32) {
    %c0_i32 = arith.constant 0 : i32
    %c0_i32_0 = arith.constant 0 : i32
    %c0_i32_1 = arith.constant 0 : i32
    return %c0_i32, %c0_i32_0 : i32, i32
  }
  func.func @transform_5(%arg0: i32, %arg1: i32) -> (i32, i32) {
    %c0_i32 = arith.constant 0 : i32
    %c0_i32_0 = arith.constant 0 : i32
    %c0_i32_1 = arith.constant 0 : i32
    return %c0_i32, %c0_i32_0 : i32, i32
  }
  func.func @transform_6(%arg0: i32, %arg1: i32) -> (i32, i32) {
    %c0_i32 = arith.constant 0 : i32
    %c0_i32_0 = arith.constant 0 : i32
    %c0_i32_1 = arith.constant 0 : i32
    return %c0_i32, %c0_i32_0 : i32, i32
  }
  func.func @transform_7(%arg0: i32, %arg1: i32) -> (i32, i32, i32) {
    %c0_i32 = arith.constant 0 : i32
    %c0_i32_0 = arith.constant 0 : i32
    %c0_i32_1 = arith.constant 0 : i32
    %c0_i32_2 = arith.constant 0 : i32
    return %c0_i32, %c0_i32_0, %c0_i32_1 : i32, i32, i32
  }
  func.func @transform_8(%arg0: i32, %arg1: i32) -> (i32, i32, i32, i32) {
    %c0_i32 = arith.constant 0 : i32
    %c0_i32_0 = arith.constant 0 : i32
    %c0_i32_1 = arith.constant 0 : i32
    return %arg0, %arg1, %c0_i32, %c0_i32_0 : i32, i32, i32, i32
  }
}

</mosaic_0001>

<llo_original>
// kernel: dense_layer_forward.1
$region0: #{dense_layer_forward.1}
  #allocation0 [shape = 'u32[]', space=smem, size = 0x4, offset = 0x4, fixed_abs, tag = 'smem constant byte address 0x4 - core index']
  #allocation1 [shape = 'u32[72,128]{1,0:T(1,128)}', space=vmem, size = 0x9000, scoped, tag = 'internal scratch']
  %s0 = inlined_call_operand.vmem [shape: bf16[2,16,16,4], index: 0, kind: input, shape index: {}, may-alias: {0,1,2}]
  %s1 = inlined_call_operand.vmem [shape: bf16[2,16,16,4], index: 1, kind: input, shape index: {}, may-alias: {0,1,2}]
  %s2 = inlined_call_operand.vmem [shape: bf16[2,16,16,4], index: 2, kind: input, shape index: {}, may-alias: {0,1,2}]
  %s3 = inlined_call_operand.vmem [shape: f32[1,4], index: 3, kind: input, shape index: {}]
  %s4 = inlined_call_operand.vmem [shape: f32[1,4], index: 4, kind: input, shape index: {}]
  %s5 = inlined_call_operand.vmem [shape: bf16[4,32], index: 5, kind: input, shape index: {}]
  %s6 = inlined_call_operand.vmem [shape: f32[1,32], index: 6, kind: input, shape index: {}]
  %s7 = inlined_call_operand.vmem [shape: bf16[3,96,8], index: 7, kind: input, shape index: {}]
  %s8 = inlined_call_operand.vmem [shape: bf16[2,16,16,8], index: 8, kind: output, shape index: {}]
  %s9 = sld [smem:[#allocation0]]
  $region65: #{dense_layer_forward.1} parent=0
    _
  %s11 = ssub.s32 1, %s9
  %s12 = scalar_select 0, %s11, %s9
  loop: start=0, step=1, limit=4
  $region2: #{dense_layer_forward.1} parent=0 // loop_pre_header
    _
  $region3: #{dense_layer_forward.1} parent=0 // loop_header
    %s14 = sphi 0, %s18
    %p15 = scmp.ge.s32.totalorder %s14, 4
    %s21 = sphi 0, %s33
    %s22 = sphi 0, %s29
    %s23 = sphi 0, %s21
    %s24 = sphi 0, %s22
    %s25 = sphi 0, %s23
    %s26 = sphi 0, %s24
    %s38 = sphi 0, %s40
    %s41 = sphi 0, %s38
    %s42 = sphi 0, %s41
    %s58 = sphi 0, %s42
    %s74 = sphi 0, %s76
    %s77 = sphi 0, %s74
    %s78 = sphi 0, %s77
    %s94 = sphi 0, %s78
    %s110 = sphi 0, %s112
    %s113 = sphi 0, %s110
    %s114 = sphi 0, %s113
    %s130 = sphi 0, %s114
    %s134 = sphi 0, %s134
    %s136 = sphi 0, %s134
    %s137 = sphi 0, %s136
    %s151 = sphi 0, %s137
    %s155 = sphi 0, %s155
    %s157 = sphi 0, %s155
    %s158 = sphi 0, %s157
    %s172 = sphi 0, %s158
    %s176 = sphi 0, %s176
    %s178 = sphi 0, %s176
    %s179 = sphi 0, %s178
    %s193 = sphi 0, %s179
    %s197 = sphi 0, %s197
    %s199 = sphi 0, %s197
    %s200 = sphi 0, %s199
    %s214 = sphi 0, %s200
    %s218 = sphi 0, %s218
    %s220 = sphi 0, %s218
    %s221 = sphi 0, %s220
    %s235 = sphi 0, %s221
    %s243 = sphi 0, %s245
    %s246 = sphi 0, %s243
    %s247 = sphi 0, %s246
    %s263 = sphi 0, %s247
  $region4: #{dense_layer_forward.1} parent=0 // loop_header_branch
    %17 = sbr.rel (%p15) target = $region8
  $region5: #{dense_layer_forward.1} parent=0 // loop_body
    %s19 = ssub.s32 %s14, 1
    %s20 = ssub.s32 %s14, 2
    %s27 = sadd.s32 1, %s22
    %p28 = scmp.ge.s32.totalorder %s27, 1
    %s29 = scalar_select %p28, 0, %s27
    %s30 = sadd.s32 1, %s21
    %s31 = scalar_select %p28, %s30, %s21
    %p32 = scmp.ge.s32.totalorder %s31, 2
    %s33 = scalar_select %p32, 0, %s31
    %s34 = ssub.s32 %s21, %s33
    %s35 = ssub.s32 %s22, %s29
    %s36 = sor.u32 %s34, %s35
    %p37 = scmp.eq.s32.totalorder %s36, 0
    %s39 = sadd.s32 %s38, 1
    %s40 = scalar_select %p37, %s38, %s39
    %p43 = pneg %p37
    %p44 = scmp.eq.s32.totalorder %s14, 1
    %p45 = por %p43, %p44
    %p46 = scmp.ne.s32.totalorder %s38, %s41
    %p47 = scmp.eq.s32.totalorder %s14, 0
    %p48 = por %p46, %p47
    %p49 = scmp.ne.s32.totalorder %s38, %s41
    %p50 = scmp.eq.s32.totalorder %s19, 1
    %p51 = por %p49, %p50
    %p52 = scmp.ne.s32.totalorder %s41, %s42
    %p53 = scmp.eq.s32.totalorder %s19, 0
    %p54 = por %p52, %p53
    %p55 = scmp.ne.s32.totalorder %s41, %s42
    %p56 = scmp.eq.s32.totalorder %s20, 1
    %p57 = por %p55, %p56
    %p59 = scmp.ne.s32.totalorder %s42, %s58
    %p60 = scmp.eq.s32.totalorder %s20, 0
    %p61 = por %p59, %p60
    %s62 = smul.u32 %s22, 16
    %s63 = ssub.s32 %s62, 1
    %p64 = scmp.gt.s32.totalorder %s63, 0
    %s65 = scalar_select %p64, %s63, 0
    %s66 = smul.u32 %s29, 16
    %s67 = ssub.s32 %s66, 1
    %p68 = scmp.gt.s32.totalorder %s67, 0
    %s69 = scalar_select %p68, %s67, 0
    %s70 = ssub.s32 %s21, %s33
    %s71 = ssub.s32 %s65, %s69
    %s72 = sor.u32 %s70, %s71
    %p73 = scmp.eq.s32.totalorder %s72, 0
    %s75 = sadd.s32 %s74, 1
    %s76 = scalar_select %p73, %s74, %s75
    %p79 = pneg %p73
    %p80 = scmp.eq.s32.totalorder %s14, 1
    %p81 = por %p79, %p80
    %p82 = scmp.ne.s32.totalorder %s74, %s77
    %p83 = scmp.eq.s32.totalorder %s14, 0
    %p84 = por %p82, %p83
    %p85 = scmp.ne.s32.totalorder %s74, %s77
    %p86 = scmp.eq.s32.totalorder %s19, 1
    %p87 = por %p85, %p86
    %p88 = scmp.ne.s32.totalorder %s77, %s78
    %p89 = scmp.eq.s32.totalorder %s19, 0
    %p90 = por %p88, %p89
    %p91 = scmp.ne.s32.totalorder %s77, %s78
    %p92 = scmp.eq.s32.totalorder %s20, 1
    %p93 = por %p91, %p92
    %p95 = scmp.ne.s32.totalorder %s78, %s94
    %p96 = scmp.eq.s32.totalorder %s20, 0
    %p97 = por %p95, %p96
    %s98 = smul.u32 %s22, 16
    %s99 = sadd.s32 %s98, 16
    %p100 = scmp.lt.s32.totalorder %s99, 15
    %s101 = scalar_select %p100, %s99, 15
    %s102 = smul.u32 %s29, 16
    %s103 = sadd.s32 %s102, 16
    %p104 = scmp.lt.s32.totalorder %s103, 15
    %s105 = scalar_select %p104, %s103, 15
    %s106 = ssub.s32 %s21, %s33
    %s107 = ssub.s32 %s101, %s105
    %s108 = sor.u32 %s106, %s107
    %p109 = scmp.eq.s32.totalorder %s108, 0
    %s111 = sadd.s32 %s110, 1
    %s112 = scalar_select %p109, %s110, %s111
    %p115 = pneg %p109
    %p116 = scmp.eq.s32.totalorder %s14, 1
    %p117 = por %p115, %p116
    %p118 = scmp.ne.s32.totalorder %s110, %s113
    %p119 = scmp.eq.s32.totalorder %s14, 0
    %p120 = por %p118, %p119
    %p121 = scmp.ne.s32.totalorder %s110, %s113
    %p122 = scmp.eq.s32.totalorder %s19, 1
    %p123 = por %p121, %p122
    %p124 = scmp.ne.s32.totalorder %s113, %s114
    %p125 = scmp.eq.s32.totalorder %s19, 0
    %p126 = por %p124, %p125
    %p127 = scmp.ne.s32.totalorder %s113, %s114
    %p128 = scmp.eq.s32.totalorder %s20, 1
    %p129 = por %p127, %p128
    %p131 = scmp.ne.s32.totalorder %s114, %s130
    %p132 = scmp.eq.s32.totalorder %s20, 0
    %p133 = por %p131, %p132
    %s135 = sadd.s32 %s134, 1
    %p138 = scmp.eq.s32.totalorder %s14, 1
    %p139 = scmp.ne.s32.totalorder %s134, %s136
    %p140 = scmp.eq.s32.totalorder %s14, 0
    %p141 = por %p139, %p140
    %p142 = scmp.ne.s32.totalorder %s134, %s136
    %p143 = scmp.eq.s32.totalorder %s19, 1
    %p144 = por %p142, %p143
    %p145 = scmp.ne.s32.totalorder %s136, %s137
    %p146 = scmp.eq.s32.totalorder %s19, 0
    %p147 = por %p145, %p146
    %p148 = scmp.ne.s32.totalorder %s136, %s137
    %p149 = scmp.eq.s32.totalorder %s20, 1
    %p150 = por %p148, %p149
    %p152 = scmp.ne.s32.totalorder %s137, %s151
    %p153 = scmp.eq.s32.totalorder %s20, 0
    %p154 = por %p152, %p153
    %s156 = sadd.s32 %s155, 1
    %p159 = scmp.eq.s32.totalorder %s14, 1
    %p160 = scmp.ne.s32.totalorder %s155, %s157
    %p161 = scmp.eq.s32.totalorder %s14, 0
    %p162 = por %p160, %p161
    %p163 = scmp.ne.s32.totalorder %s155, %s157
    %p164 = scmp.eq.s32.totalorder %s19, 1
    %p165 = por %p163, %p164
    %p166 = scmp.ne.s32.totalorder %s157, %s158
    %p167 = scmp.eq.s32.totalorder %s19, 0
    %p168 = por %p166, %p167
    %p169 = scmp.ne.s32.totalorder %s157, %s158
    %p170 = scmp.eq.s32.totalorder %s20, 1
    %p171 = por %p169, %p170
    %p173 = scmp.ne.s32.totalorder %s158, %s172
    %p174 = scmp.eq.s32.totalorder %s20, 0
    %p175 = por %p173, %p174
    %s177 = sadd.s32 %s176, 1
    %p180 = scmp.eq.s32.totalorder %s14, 1
    %p181 = scmp.ne.s32.totalorder %s176, %s178
    %p182 = scmp.eq.s32.totalorder %s14, 0
    %p183 = por %p181, %p182
    %p184 = scmp.ne.s32.totalorder %s176, %s178
    %p185 = scmp.eq.s32.totalorder %s19, 1
    %p186 = por %p184, %p185
    %p187 = scmp.ne.s32.totalorder %s178, %s179
    %p188 = scmp.eq.s32.totalorder %s19, 0
    %p189 = por %p187, %p188
    %p190 = scmp.ne.s32.totalorder %s178, %s179
    %p191 = scmp.eq.s32.totalorder %s20, 1
    %p192 = por %p190, %p191
    %p194 = scmp.ne.s32.totalorder %s179, %s193
    %p195 = scmp.eq.s32.totalorder %s20, 0
    %p196 = por %p194, %p195
    %s198 = sadd.s32 %s197, 1
    %p201 = scmp.eq.s32.totalorder %s14, 1
    %p202 = scmp.ne.s32.totalorder %s197, %s199
    %p203 = scmp.eq.s32.totalorder %s14, 0
    %p204 = por %p202, %p203
    %p205 = scmp.ne.s32.totalorder %s197, %s199
    %p206 = scmp.eq.s32.totalorder %s19, 1
    %p207 = por %p205, %p206
    %p208 = scmp.ne.s32.totalorder %s199, %s200
    %p209 = scmp.eq.s32.totalorder %s19, 0
    %p210 = por %p208, %p209
    %p211 = scmp.ne.s32.totalorder %s199, %s200
    %p212 = scmp.eq.s32.totalorder %s20, 1
    %p213 = por %p211, %p212
    %p215 = scmp.ne.s32.totalorder %s200, %s214
    %p216 = scmp.eq.s32.totalorder %s20, 0
    %p217 = por %p215, %p216
    %s219 = sadd.s32 %s218, 1
    %p222 = scmp.eq.s32.totalorder %s14, 1
    %p223 = scmp.ne.s32.totalorder %s218, %s220
    %p224 = scmp.eq.s32.totalorder %s14, 0
    %p225 = por %p223, %p224
    %p226 = scmp.ne.s32.totalorder %s218, %s220
    %p227 = scmp.eq.s32.totalorder %s19, 1
    %p228 = por %p226, %p227
    %p229 = scmp.ne.s32.totalorder %s220, %s221
    %p230 = scmp.eq.s32.totalorder %s19, 0
    %p231 = por %p229, %p230
    %p232 = scmp.ne.s32.totalorder %s220, %s221
    %p233 = scmp.eq.s32.totalorder %s20, 1
    %p234 = por %p232, %p233
    %p236 = scmp.ne.s32.totalorder %s221, %s235
    %p237 = scmp.eq.s32.totalorder %s20, 0
    %p238 = por %p236, %p237
    %s239 = ssub.s32 %s21, %s33
    %s240 = ssub.s32 %s22, %s29
    %s241 = sor.u32 %s239, %s240
    %p242 = scmp.eq.s32.totalorder %s241, 0
    %s244 = sadd.s32 %s243, 1
    %s245 = scalar_select %p242, %s243, %s244
    %p248 = pneg %p242
    %p249 = scmp.eq.s32.totalorder %s14, 1
    %p250 = por %p248, %p249
    %p251 = scmp.ne.s32.totalorder %s243, %s246
    %p252 = scmp.eq.s32.totalorder %s14, 0
    %p253 = por %p251, %p252
    %p254 = scmp.ne.s32.totalorder %s243, %s246
    %p255 = scmp.eq.s32.totalorder %s19, 1
    %p256 = por %p254, %p255
    %p257 = scmp.ne.s32.totalorder %s246, %s247
    %p258 = scmp.eq.s32.totalorder %s19, 0
    %p259 = por %p257, %p258
    %p260 = scmp.ne.s32.totalorder %s246, %s247
    %p261 = scmp.eq.s32.totalorder %s20, 1
    %p262 = por %p260, %p261
    %p264 = scmp.ne.s32.totalorder %s247, %s263
    %p265 = scmp.eq.s32.totalorder %s20, 0
    %p266 = por %p264, %p265
    %p267 = scmp.le.s32.totalorder 1, %s14
    %p268 = scmp.lt.s32.totalorder %s14, 3
    %p269 = pnand %p267, %p268
    %p270 = pneg %p269
    // Predicated region
    $region9: #{dense_layer_forward.1} parent=5 // pred_check
      _
    $region10: #{dense_layer_forward.1} parent=5 // pred_check_branch
      %272 = sbr.rel (%p269) target = $region12
    $region11: #{dense_layer_forward.1} parent=5 // pred_region
      %s273 = ssub.s32 %s14, 1
      // Predicated region
      $region13: #{dense_layer_forward.1} parent=11 // pred_check
        %p274 = pneg %p147
      $region14: #{dense_layer_forward.1} parent=11 // pred_check_branch
        %276 = sbr.rel (%p274) target = $region16
      $region15: #{dense_layer_forward.1} parent=11 // pred_region
        _
      $region16: #{dense_layer_forward.1} parent=11 // pred_fallthru
        _
      // Predicated region
      $region17: #{dense_layer_forward.1} parent=11 // pred_check
        %p277 = pneg %p168
      $region18: #{dense_layer_forward.1} parent=11 // pred_check_branch
        %279 = sbr.rel (%p277) target = $region20
      $region19: #{dense_layer_forward.1} parent=11 // pred_region
        _
      $region20: #{dense_layer_forward.1} parent=11 // pred_fallthru
        _
      // Predicated region
      $region21: #{dense_layer_forward.1} parent=11 // pred_check
        %p280 = pneg %p189
      $region22: #{dense_layer_forward.1} parent=11 // pred_check_branch
        %282 = sbr.rel (%p280) target = $region24
      $region23: #{dense_layer_forward.1} parent=11 // pred_region
        _
      $region24: #{dense_layer_forward.1} parent=11 // pred_fallthru
        _
      // Predicated region
      $region25: #{dense_layer_forward.1} parent=11 // pred_check
        %p283 = pneg %p210
      $region26: #{dense_layer_forward.1} parent=11 // pred_check_branch
        %285 = sbr.rel (%p283) target = $region28
      $region27: #{dense_layer_forward.1} parent=11 // pred_region
        _
      $region28: #{dense_layer_forward.1} parent=11 // pred_fallthru
        _
      // Predicated region
      $region29: #{dense_layer_forward.1} parent=11 // pred_check
        %p286 = pneg %p231
      $region30: #{dense_layer_forward.1} parent=11 // pred_check_branch
        %288 = sbr.rel (%p286) target = $region32
      $region31: #{dense_layer_forward.1} parent=11 // pred_region
        _
      $region32: #{dense_layer_forward.1} parent=11 // pred_fallthru
        _
    $region12: #{dense_layer_forward.1} parent=5 // pred_fallthru
      _
    %p289 = scmp.lt.s32.totalorder %s14, 2
    // Predicated region
    $region33: #{dense_layer_forward.1} parent=5 // pred_check
      %p290 = pneg %p289
    $region34: #{dense_layer_forward.1} parent=5 // pred_check_branch
      %292 = sbr.rel (%p290) target = $region36
    $region35: #{dense_layer_forward.1} parent=5 // pred_region
      // Predicated region
      $region37: #{dense_layer_forward.1} parent=35 // pred_check
        %p293 = pneg %p48
      $region38: #{dense_layer_forward.1} parent=35 // pred_check_branch
        %295 = sbr.rel (%p293) target = $region40
      $region39: #{dense_layer_forward.1} parent=35 // pred_region
        %s296 = smul.u32 16, %s22
        %p297 = scmp.lt.s32.totalorder %s21, 1
        %s298 = scalar_select %p297, %s21, 1
        %p299 = scmp.lt.s32.totalorder %s296, 15
        %s300 = scalar_select %p299, %s296, 15
        %s301 = smul.addr %s300, 2
        %s302 = smul.addr %s298, 32
        %s303 = sadd.s32 %s301, %s302
        %s304 = smul.addr %s303, 4
        %s305 = scalar_lea.vmem %s0, %s304
        %s306 = smul.u32 16, %s22
      $region40: #{dense_layer_forward.1} parent=35 // pred_fallthru
        _
      // Predicated region
      $region41: #{dense_layer_forward.1} parent=35 // pred_check
        %p307 = pneg %p84
      $region42: #{dense_layer_forward.1} parent=35 // pred_check_branch
        %309 = sbr.rel (%p307) target = $region44
      $region43: #{dense_layer_forward.1} parent=35 // pred_region
        %s310 = smul.u32 %s22, 16
        %s311 = ssub.s32 %s310, 1
        %p312 = scmp.gt.s32.totalorder %s311, 0
        %s313 = scalar_select %p312, %s311, 0
        %p314 = scmp.lt.s32.totalorder %s21, 1
        %s315 = scalar_select %p314, %s21, 1
        %p316 = scmp.lt.s32.totalorder %s313, 15
        %s317 = scalar_select %p316, %s313, 15
        %s318 = smul.addr %s317, 2
        %s319 = smul.addr %s315, 32
        %s320 = sadd.s32 %s318, %s319
        %s321 = smul.addr %s320, 4
        %s322 = scalar_lea.vmem %s1, %s321
        %s323 = smul.u32 %s22, 16
        %s324 = ssub.s32 %s323, 1
        %p325 = scmp.gt.s32.totalorder %s324, 0
        %s326 = scalar_select %p325, %s324, 0
      $region44: #{dense_layer_forward.1} parent=35 // pred_fallthru
        _
      // Predicated region
      $region45: #{dense_layer_forward.1} parent=35 // pred_check
        %p327 = pneg %p120
      $region46: #{dense_layer_forward.1} parent=35 // pred_check_branch
        %329 = sbr.rel (%p327) target = $region48
      $region47: #{dense_layer_forward.1} parent=35 // pred_region
        %s330 = smul.u32 %s22, 16
        %s331 = sadd.s32 %s330, 16
        %p332 = scmp.lt.s32.totalorder %s331, 15
        %s333 = scalar_select %p332, %s331, 15
        %p334 = scmp.lt.s32.totalorder %s21, 1
        %s335 = scalar_select %p334, %s21, 1
        %p336 = scmp.lt.s32.totalorder %s333, 15
        %s337 = scalar_select %p336, %s333, 15
        %s338 = smul.addr %s337, 2
        %s339 = smul.addr %s335, 32
        %s340 = sadd.s32 %s338, %s339
        %s341 = smul.addr %s340, 4
        %s342 = scalar_lea.vmem %s2, %s341
        %s343 = smul.u32 %s22, 16
        %s344 = sadd.s32 %s343, 16
        %p345 = scmp.lt.s32.totalorder %s344, 15
        %s346 = scalar_select %p345, %s344, 15
      $region48: #{dense_layer_forward.1} parent=35 // pred_fallthru
        _
    $region36: #{dense_layer_forward.1} parent=5 // pred_fallthru
      _
    %p347 = scmp.le.s32.totalorder 1, %s14
    %p348 = scmp.lt.s32.totalorder %s14, 3
    %p349 = pnand %p347, %p348
    %p350 = pneg %p349
    // Predicated region
    $region49: #{dense_layer_forward.1} parent=5 // pred_check
      _
    $region50: #{dense_layer_forward.1} parent=5 // pred_check_branch
      %352 = sbr.rel (%p349) target = $region52
    $region51: #{dense_layer_forward.1} parent=5 // pred_region
      %s353 = ssub.s32 %s14, 1
      %s354 = smul.u32 16, %s24
      %p355 = scmp.lt.s32.totalorder %s23, 1
      %s356 = scalar_select %p355, %s23, 1
      %p357 = scmp.lt.s32.totalorder %s354, 15
      %s358 = scalar_select %p357, %s354, 15
      %s359 = smul.addr %s358, 2
      %s360 = smul.addr %s356, 32
      %s361 = sadd.s32 %s359, %s360
      %s362 = smul.addr %s361, 4
      %s363 = scalar_lea.vmem %s0, %s362
      %p364 = pneg %p54
      %p365 = pneg %p51
      %s366 = smul.u32 %s24, 16
      %s367 = ssub.s32 %s366, 1
      %p368 = scmp.gt.s32.totalorder %s367, 0
      %s369 = scalar_select %p368, %s367, 0
      %p370 = scmp.lt.s32.totalorder %s23, 1
      %s371 = scalar_select %p370, %s23, 1
      %p372 = scmp.lt.s32.totalorder %s369, 15
      %s373 = scalar_select %p372, %s369, 15
      %s374 = smul.addr %s373, 2
      %s375 = smul.addr %s371, 32
      %s376 = sadd.s32 %s374, %s375
      %s377 = smul.addr %s376, 4
      %s378 = scalar_lea.vmem %s1, %s377
      %p379 = pneg %p90
      %p380 = pneg %p87
      %s381 = smul.u32 %s24, 16
      %s382 = sadd.s32 %s381, 16
      %p383 = scmp.lt.s32.totalorder %s382, 15
      %s384 = scalar_select %p383, %s382, 15
      %p385 = scmp.lt.s32.totalorder %s23, 1
      %s386 = scalar_select %p385, %s23, 1
      %p387 = scmp.lt.s32.totalorder %s384, 15
      %s388 = scalar_select %p387, %s384, 15
      %s389 = smul.addr %s388, 2
      %s390 = smul.addr %s386, 32
      %s391 = sadd.s32 %s389, %s390
      %s392 = smul.addr %s391, 4
      %s393 = scalar_lea.vmem %s2, %s392
      %p394 = pneg %p126
      %p395 = pneg %p123
      %p396 = pneg %p147
      %p397 = pneg %p144
      %p398 = pneg %p168
      %p399 = pneg %p165
      %p400 = pneg %p189
      %p401 = pneg %p186
      %p402 = pneg %p210
      %p403 = pneg %p207
      %p404 = pneg %p231
      %p405 = pneg %p228
      %p406 = pneg %p259
      %p407 = pneg %p256
      %s408 = smul.u32 16, %s24
      %p409 = scmp.lt.s32.totalorder %s23, 1
      %s410 = scalar_select %p409, %s23, 1
      %p411 = scmp.lt.s32.totalorder %s408, 15
      %s412 = scalar_select %p411, %s408, 15
      %s413 = smul.addr %s412, 2
      %s414 = smul.addr %s410, 32
      %s415 = sadd.s32 %s413, %s414
      %s416 = smul.addr %s415, 4
      %s417 = scalar_lea.vmem %s8, %s416
      %s418 = smul.u32 16, %s24
      %p419 = scmp.lt.s32.totalorder %s23, 1
      %s420 = scalar_select %p419, %s23, 1
      %p421 = scmp.lt.s32.totalorder %s418, 15
      %s422 = scalar_select %p421, %s418, 15
      %s423 = smul.addr %s422, 2
      %s424 = smul.addr %s420, 32
      %s425 = sadd.s32 %s423, %s424
      %s426 = smul.addr %s425, 4
      %s427 = scalar_lea.vmem %s0, %s426
      %s428 = smul.u32 16, %s24
      %s429 = smul.u32 %s24, 16
      %s430 = ssub.s32 %s429, 1
      %p431 = scmp.gt.s32.totalorder %s430, 0
      %s432 = scalar_select %p431, %s430, 0
      %p433 = scmp.lt.s32.totalorder %s23, 1
      %s434 = scalar_select %p433, %s23, 1
      %p435 = scmp.lt.s32.totalorder %s432, 15
      %s436 = scalar_select %p435, %s432, 15
      %s437 = smul.addr %s436, 2
      %s438 = smul.addr %s434, 32
      %s439 = sadd.s32 %s437, %s438
      %s440 = smul.addr %s439, 4
      %s441 = scalar_lea.vmem %s1, %s440
      %s442 = smul.u32 %s24, 16
      %s443 = ssub.s32 %s442, 1
      %p444 = scmp.gt.s32.totalorder %s443, 0
      %s445 = scalar_select %p444, %s443, 0
      %s446 = smul.u32 %s24, 16
      %s447 = sadd.s32 %s446, 16
      %p448 = scmp.lt.s32.totalorder %s447, 15
      %s449 = scalar_select %p448, %s447, 15
      %p450 = scmp.lt.s32.totalorder %s23, 1
      %s451 = scalar_select %p450, %s23, 1
      %p452 = scmp.lt.s32.totalorder %s449, 15
      %s453 = scalar_select %p452, %s449, 15
      %s454 = smul.addr %s453, 2
      %s455 = smul.addr %s451, 32
      %s456 = sadd.s32 %s454, %s455
      %s457 = smul.addr %s456, 4
      %s458 = scalar_lea.vmem %s2, %s457
      %s459 = smul.u32 %s24, 16
      %s460 = sadd.s32 %s459, 16
      %p461 = scmp.lt.s32.totalorder %s460, 15
      %s462 = scalar_select %p461, %s460, 15
      %s463 = smul.u32 16, %s24
      %p464 = scmp.lt.s32.totalorder %s23, 1
      %s465 = scalar_select %p464, %s23, 1
      %p466 = scmp.lt.s32.totalorder %s463, 15
      %s467 = scalar_select %p466, %s463, 15
      %s468 = smul.addr %s467, 2
      %s469 = smul.addr %s465, 32
      %s470 = sadd.s32 %s468, %s469
      %s471 = smul.addr %s470, 4
      %s472 = scalar_lea.vmem %s8, %s471
      %s473 = smul.u32 16, %s24
      %v475 = vld [vmem:[%s441] sm:$0xf]
      %v476 = vld [vmem:[%s441 + $0x4] sm:$0xf]
      %v477 = vld [vmem:[%s427] sm:$0xf]
      %v478 = vld [vmem:[%s427 + $0x4] sm:$0xf]
      %v479 = vld [vmem:[%s427 + $0x8] sm:$0xf]
      %v480 = vld [vmem:[%s427 + $0xc] sm:$0xf]
      %v481 = vld [vmem:[%s427 + $0x10] sm:$0xf]
      %v482 = vld [vmem:[%s427 + $0x14] sm:$0xf]
      %v483 = vld [vmem:[%s427 + $0x18] sm:$0xf]
      %v484 = vld [vmem:[%s427 + $0x1c] sm:$0xf]
      %v485 = vld [vmem:[%s427 + $0x20] sm:$0xf]
      %v486 = vld [vmem:[%s427 + $0x24] sm:$0xf]
      %v487 = vld [vmem:[%s427 + $0x28] sm:$0xf]
      %v488 = vld [vmem:[%s427 + $0x2c] sm:$0xf]
      %v489 = vld [vmem:[%s427 + $0x30] sm:$0xf]
      %v490 = vld [vmem:[%s427 + $0x34] sm:$0xf]
      %v491 = vld [vmem:[%s427 + $0x38] sm:$0xf]
      %v492 = vld [vmem:[%s427 + $0x3c] sm:$0xf]
      %v493 = vld [vmem:[%s427 + $0x40] sm:$0xf]
      %v494 = vld [vmem:[%s427 + $0x44] sm:$0xf]
      %v495 = vld [vmem:[%s427 + $0x48] sm:$0xf]
      %v496 = vld [vmem:[%s427 + $0x4c] sm:$0xf]
      %v497 = vld [vmem:[%s427 + $0x50] sm:$0xf]
      %v498 = vld [vmem:[%s427 + $0x54] sm:$0xf]
      %v499 = vld [vmem:[%s427 + $0x58] sm:$0xf]
      %v500 = vld [vmem:[%s427 + $0x5c] sm:$0xf]
      %v501 = vld [vmem:[%s427 + $0x60] sm:$0xf]
      %v502 = vld [vmem:[%s427 + $0x64] sm:$0xf]
      %v503 = vld [vmem:[%s427 + $0x68] sm:$0xf]
      %v504 = vld [vmem:[%s427 + $0x6c] sm:$0xf]
      %v505 = vld [vmem:[%s427 + $0x70] sm:$0xf]
      %v506 = vld [vmem:[%s427 + $0x74] sm:$0xf]
      %v507 = vld [vmem:[%s427 + $0x78] sm:$0xf]
      %v508 = vld [vmem:[%s427 + $0x7c] sm:$0xf]
      %v509 = vld [vmem:[%s458] sm:$0xf]
      %v510 = vld [vmem:[%s458 + $0x4] sm:$0xf]
      %v511 = vunpack.c.l.bf16 %v475
      %v512 = vunpack.c.l.bf16 %v476
      %v513 = vunpack.c.l.bf16 %v477
      %v514 = vunpack.c.l.bf16 %v478
      %v515 = vunpack.c.l.bf16 %v479
      %v516 = vunpack.c.l.bf16 %v480
      %v517 = vunpack.c.l.bf16 %v481
      %v518 = vunpack.c.l.bf16 %v482
      %v519 = vunpack.c.l.bf16 %v483
      %v520 = vunpack.c.l.bf16 %v484
      %v521 = vunpack.c.l.bf16 %v485
      %v522 = vunpack.c.l.bf16 %v486
      %v523 = vunpack.c.l.bf16 %v487
      %v524 = vunpack.c.l.bf16 %v488
      %v525 = vunpack.c.l.bf16 %v489
      %v526 = vunpack.c.l.bf16 %v490
      %v527 = vunpack.c.l.bf16 %v491
      %v528 = vunpack.c.l.bf16 %v492
      %v529 = vunpack.c.l.bf16 %v493
      %v530 = vunpack.c.l.bf16 %v494
      %v531 = vunpack.c.l.bf16 %v495
      %v532 = vunpack.c.l.bf16 %v496
      %v533 = vunpack.c.l.bf16 %v497
      %v534 = vunpack.c.l.bf16 %v498
      %v535 = vunpack.c.l.bf16 %v499
      %v536 = vunpack.c.l.bf16 %v500
      %v537 = vunpack.c.l.bf16 %v501
      %v538 = vunpack.c.l.bf16 %v502
      %v539 = vunpack.c.l.bf16 %v503
      %v540 = vunpack.c.l.bf16 %v504
      %v541 = vunpack.c.l.bf16 %v505
      %v542 = vunpack.c.l.bf16 %v506
      %v543 = vunpack.c.l.bf16 %v507
      %v544 = vunpack.c.l.bf16 %v508
      %v545 = vunpack.c.l.bf16 %v509
      %v546 = vunpack.c.l.bf16 %v510
      %v547 = vld [vmem:[%s3] sm:$0x1]
      %v549 = vperm.slane %v547, 0
      %v551 = vmul.f32 %v511, %v549
      %v552 = vmul.f32 %v512, %v549
      %v553 = vmul.f32 %v513, %v549
      %v554 = vmul.f32 %v514, %v549
      %v555 = vmul.f32 %v515, %v549
      %v556 = vmul.f32 %v516, %v549
      %v557 = vmul.f32 %v517, %v549
      %v558 = vmul.f32 %v518, %v549
      %v559 = vmul.f32 %v519, %v549
      %v560 = vmul.f32 %v520, %v549
      %v561 = vmul.f32 %v521, %v549
      %v562 = vmul.f32 %v522, %v549
      %v563 = vmul.f32 %v523, %v549
      %v564 = vmul.f32 %v524, %v549
      %v565 = vmul.f32 %v525, %v549
      %v566 = vmul.f32 %v526, %v549
      %v567 = vmul.f32 %v527, %v549
      %v568 = vmul.f32 %v528, %v549
      %v569 = vmul.f32 %v529, %v549
      %v570 = vmul.f32 %v530, %v549
      %v571 = vmul.f32 %v531, %v549
      %v572 = vmul.f32 %v532, %v549
      %v573 = vmul.f32 %v533, %v549
      %v574 = vmul.f32 %v534, %v549
      %v575 = vmul.f32 %v535, %v549
      %v576 = vmul.f32 %v536, %v549
      %v577 = vmul.f32 %v537, %v549
      %v578 = vmul.f32 %v538, %v549
      %v579 = vmul.f32 %v539, %v549
      %v580 = vmul.f32 %v540, %v549
      %v581 = vmul.f32 %v541, %v549
      %v582 = vmul.f32 %v542, %v549
      %v583 = vmul.f32 %v543, %v549
      %v584 = vmul.f32 %v544, %v549
      %v585 = vmul.f32 %v545, %v549
      %v586 = vmul.f32 %v546, %v549
      %v587 = vld [vmem:[%s4] sm:$0x1]
      %v589 = vperm.slane %v587, 0
      %v591 = vadd.f32 %v551, %v589
      %v592 = vadd.f32 %v552, %v589
      %v593 = vadd.f32 %v553, %v589
      %v594 = vadd.f32 %v554, %v589
      %v595 = vadd.f32 %v555, %v589
      %v596 = vadd.f32 %v556, %v589
      %v597 = vadd.f32 %v557, %v589
      %v598 = vadd.f32 %v558, %v589
      %v599 = vadd.f32 %v559, %v589
      %v600 = vadd.f32 %v560, %v589
      %v601 = vadd.f32 %v561, %v589
      %v602 = vadd.f32 %v562, %v589
      %v603 = vadd.f32 %v563, %v589
      %v604 = vadd.f32 %v564, %v589
      %v605 = vadd.f32 %v565, %v589
      %v606 = vadd.f32 %v566, %v589
      %v607 = vadd.f32 %v567, %v589
      %v608 = vadd.f32 %v568, %v589
      %v609 = vadd.f32 %v569, %v589
      %v610 = vadd.f32 %v570, %v589
      %v611 = vadd.f32 %v571, %v589
      %v612 = vadd.f32 %v572, %v589
      %v613 = vadd.f32 %v573, %v589
      %v614 = vadd.f32 %v574, %v589
      %v615 = vadd.f32 %v575, %v589
      %v616 = vadd.f32 %v576, %v589
      %v617 = vadd.f32 %v577, %v589
      %v618 = vadd.f32 %v578, %v589
      %v619 = vadd.f32 %v579, %v589
      %v620 = vadd.f32 %v580, %v589
      %v621 = vadd.f32 %v581, %v589
      %v622 = vadd.f32 %v582, %v589
      %v623 = vadd.f32 %v583, %v589
      %v624 = vadd.f32 %v584, %v589
      %v625 = vadd.f32 %v585, %v589
      %v626 = vadd.f32 %v586, %v589
      %v627 = vmax.f32 %v591, 0.0
      %v628 = vmax.f32 %v592, 0.0
      %v629 = vmax.f32 %v593, 0.0
      %v630 = vmax.f32 %v594, 0.0
      %v631 = vmax.f32 %v595, 0.0
      %v632 = vmax.f32 %v596, 0.0
      %v633 = vmax.f32 %v597, 0.0
      %v634 = vmax.f32 %v598, 0.0
      %v635 = vmax.f32 %v599, 0.0
      %v636 = vmax.f32 %v600, 0.0
      %v637 = vmax.f32 %v601, 0.0
      %v638 = vmax.f32 %v602, 0.0
      %v639 = vmax.f32 %v603, 0.0
      %v640 = vmax.f32 %v604, 0.0
      %v641 = vmax.f32 %v605, 0.0
      %v642 = vmax.f32 %v606, 0.0
      %v643 = vmax.f32 %v607, 0.0
      %v644 = vmax.f32 %v608, 0.0
      %v645 = vmax.f32 %v609, 0.0
      %v646 = vmax.f32 %v610, 0.0
      %v647 = vmax.f32 %v611, 0.0
      %v648 = vmax.f32 %v612, 0.0
      %v649 = vmax.f32 %v613, 0.0
      %v650 = vmax.f32 %v614, 0.0
      %v651 = vmax.f32 %v615, 0.0
      %v652 = vmax.f32 %v616, 0.0
      %v653 = vmax.f32 %v617, 0.0
      %v654 = vmax.f32 %v618, 0.0
      %v655 = vmax.f32 %v619, 0.0
      %v656 = vmax.f32 %v620, 0.0
      %v657 = vmax.f32 %v621, 0.0
      %v658 = vmax.f32 %v622, 0.0
      %v659 = vmax.f32 %v623, 0.0
      %v660 = vmax.f32 %v624, 0.0
      %v661 = vmax.f32 %v625, 0.0
      %v662 = vmax.f32 %v626, 0.0
      %v663 = vpack.c.bf16 %v628, %v627
      %v664 = vpack.c.bf16 %v630, %v629
      %v665 = vpack.c.bf16 %v632, %v631
      %v666 = vpack.c.bf16 %v634, %v633
      %v667 = vpack.c.bf16 %v636, %v635
      %v668 = vpack.c.bf16 %v638, %v637
      %v669 = vpack.c.bf16 %v640, %v639
      %v670 = vpack.c.bf16 %v642, %v641
      %v671 = vpack.c.bf16 %v644, %v643
      %v672 = vpack.c.bf16 %v646, %v645
      %v673 = vpack.c.bf16 %v648, %v647
      %v674 = vpack.c.bf16 %v650, %v649
      %v675 = vpack.c.bf16 %v652, %v651
      %v676 = vpack.c.bf16 %v654, %v653
      %v677 = vpack.c.bf16 %v656, %v655
      %v678 = vpack.c.bf16 %v658, %v657
      %v679 = vpack.c.bf16 %v660, %v659
      %v680 = vpack.c.bf16 %v662, %v661
      %v681 = vld [vmem:[%s5] sm:$0x3]
      %v682 = vld [vmem:[%s6] sm:$0x1]
      %v684 = vperm.slane %v682, 0
      %vm686 = vcmask 31744
      %v688 = vsel %vm686, %v663, 0
      %v691 = vsel %vm686, %v664, 0
      %v694 = vsel %vm686, %v665, 0
      %v697 = vsel %vm686, %v666, 0
      %v700 = vsel %vm686, %v667, 0
      %v703 = vsel %vm686, %v668, 0
      %v706 = vsel %vm686, %v669, 0
      %v709 = vsel %vm686, %v670, 0
      %v712 = vsel %vm686, %v671, 0
      %v715 = vsel %vm686, %v672, 0
      %v718 = vsel %vm686, %v673, 0
      %v721 = vsel %vm686, %v674, 0
      %v724 = vsel %vm686, %v675, 0
      %v727 = vsel %vm686, %v676, 0
      %v730 = vsel %vm686, %v677, 0
      %v733 = vsel %vm686, %v678, 0
      %v736 = vsel %vm686, %v679, 0
      %v739 = vsel %vm686, %v680, 0
      %vm741 = vcmask 1041408
      %v743 = vsel %vm741, %v681, 0
      %745 = vmatpush.bf16.msra.mxu0 0
      %746 = vmatpush.bf16.msra.mxu0 0
      %747 = vmatpush.bf16.msra.mxu0 0
      %748 = vmatpush.bf16.msra.mxu0 0
      %749 = vmatpush.bf16.msra.mxu0 0
      %750 = vmatpush.bf16.msra.mxu0 0
      %751 = vmatpush.bf16.msra.mxu0 0
      %752 = vmatpush.bf16.msra.mxu0 %v743
      %753 = vmatmul.bf16.gmra.mxu0 %v688
      %v754 = vpop.f32.mrf.mxu0
      %v755 = vadd.f32 %v684, %v754
      %v756 = vpop.f32.mrf.mxu0
      %v757 = vadd.f32 %v684, %v756
      %758 = vmatmul.bf16.gmra.mxu0 %v691
      %v759 = vpop.f32.mrf.mxu0
      %v760 = vadd.f32 %v684, %v759
      %v761 = vpop.f32.mrf.mxu0
      %v762 = vadd.f32 %v684, %v761
      %763 = vmatmul.bf16.gmra.mxu0 %v694
      %v764 = vpop.f32.mrf.mxu0
      %v765 = vadd.f32 %v684, %v764
      %v766 = vpop.f32.mrf.mxu0
      %v767 = vadd.f32 %v684, %v766
      %768 = vmatmul.bf16.gmra.mxu0 %v697
      %v769 = vpop.f32.mrf.mxu0
      %v770 = vadd.f32 %v684, %v769
      %v771 = vpop.f32.mrf.mxu0
      %v772 = vadd.f32 %v684, %v771
      %773 = vmatmul.bf16.gmra.mxu0 %v700
      %v774 = vpop.f32.mrf.mxu0
      %v775 = vadd.f32 %v684, %v774
      %v776 = vpop.f32.mrf.mxu0
      %v777 = vadd.f32 %v684, %v776
      %778 = vmatmul.bf16.gmra.mxu0 %v703
      %v779 = vpop.f32.mrf.mxu0
      %v780 = vadd.f32 %v684, %v779
      %v781 = vpop.f32.mrf.mxu0
      %v782 = vadd.f32 %v684, %v781
      %783 = vmatmul.bf16.gmra.mxu0 %v706
      %v784 = vpop.f32.mrf.mxu0
      %v785 = vadd.f32 %v684, %v784
      %v786 = vpop.f32.mrf.mxu0
      %v787 = vadd.f32 %v684, %v786
      %788 = vmatmul.bf16.gmra.mxu0 %v709
      %v789 = vpop.f32.mrf.mxu0
      %v790 = vadd.f32 %v684, %v789
      %v791 = vpop.f32.mrf.mxu0
      %v792 = vadd.f32 %v684, %v791
      %793 = vmatmul.bf16.gmra.mxu0 %v712
      %v794 = vpop.f32.mrf.mxu0
      %v795 = vadd.f32 %v684, %v794
      %v796 = vpop.f32.mrf.mxu0
      %v797 = vadd.f32 %v684, %v796
      %798 = vmatmul.bf16.gmra.mxu0 %v715
      %v799 = vpop.f32.mrf.mxu0
      %v800 = vadd.f32 %v684, %v799
      %v801 = vpop.f32.mrf.mxu0
      %v802 = vadd.f32 %v684, %v801
      %803 = vmatmul.bf16.gmra.mxu0 %v718
      %v804 = vpop.f32.mrf.mxu0
      %v805 = vadd.f32 %v684, %v804
      %v806 = vpop.f32.mrf.mxu0
      %v807 = vadd.f32 %v684, %v806
      %808 = vmatmul.bf16.gmra.mxu0 %v721
      %v809 = vpop.f32.mrf.mxu0
      %v810 = vadd.f32 %v684, %v809
      %v811 = vpop.f32.mrf.mxu0
      %v812 = vadd.f32 %v684, %v811
      %813 = vmatmul.bf16.gmra.mxu0 %v724
      %v814 = vpop.f32.mrf.mxu0
      %v815 = vadd.f32 %v684, %v814
      %v816 = vpop.f32.mrf.mxu0
      %v817 = vadd.f32 %v684, %v816
      %818 = vmatmul.bf16.gmra.mxu0 %v727
      %v819 = vpop.f32.mrf.mxu0
      %v820 = vadd.f32 %v684, %v819
      %v821 = vpop.f32.mrf.mxu0
      %v822 = vadd.f32 %v684, %v821
      %823 = vmatmul.bf16.gmra.mxu0 %v730
      %v824 = vpop.f32.mrf.mxu0
      %v825 = vadd.f32 %v684, %v824
      %v826 = vpop.f32.mrf.mxu0
      %v827 = vadd.f32 %v684, %v826
      %828 = vmatmul.bf16.gmra.mxu0 %v733
      %v829 = vpop.f32.mrf.mxu0
      %v830 = vadd.f32 %v684, %v829
      %v831 = vpop.f32.mrf.mxu0
      %v832 = vadd.f32 %v684, %v831
      %833 = vmatmul.bf16.gmra.mxu0 %v736
      %v834 = vpop.f32.mrf.mxu0
      %v835 = vadd.f32 %v684, %v834
      %v836 = vpop.f32.mrf.mxu0
      %v837 = vadd.f32 %v684, %v836
      %838 = vmatmul.bf16.gmra.mxu0 %v739
      %v839 = vpop.f32.mrf.mxu0
      %v840 = vadd.f32 %v684, %v839
      %v841 = vpop.f32.mrf.mxu0
      %v842 = vadd.f32 %v684, %v841
      %843 = vdwg.mxu0
      %v844 = vmax.f32 %v755, 0.0
      %v845 = vmax.f32 %v757, 0.0
      %v846 = vmax.f32 %v760, 0.0
      %v847 = vmax.f32 %v762, 0.0
      %v848 = vmax.f32 %v765, 0.0
      %v849 = vmax.f32 %v767, 0.0
      %v850 = vmax.f32 %v770, 0.0
      %v851 = vmax.f32 %v772, 0.0
      %v852 = vmax.f32 %v775, 0.0
      %v853 = vmax.f32 %v777, 0.0
      %v854 = vmax.f32 %v780, 0.0
      %v855 = vmax.f32 %v782, 0.0
      %v856 = vmax.f32 %v785, 0.0
      %v857 = vmax.f32 %v787, 0.0
      %v858 = vmax.f32 %v790, 0.0
      %v859 = vmax.f32 %v792, 0.0
      %v860 = vmax.f32 %v795, 0.0
      %v861 = vmax.f32 %v797, 0.0
      %v862 = vmax.f32 %v800, 0.0
      %v863 = vmax.f32 %v802, 0.0
      %v864 = vmax.f32 %v805, 0.0
      %v865 = vmax.f32 %v807, 0.0
      %v866 = vmax.f32 %v810, 0.0
      %v867 = vmax.f32 %v812, 0.0
      %v868 = vmax.f32 %v815, 0.0
      %v869 = vmax.f32 %v817, 0.0
      %v870 = vmax.f32 %v820, 0.0
      %v871 = vmax.f32 %v822, 0.0
      %v872 = vmax.f32 %v825, 0.0
      %v873 = vmax.f32 %v827, 0.0
      %v874 = vmax.f32 %v830, 0.0
      %v875 = vmax.f32 %v832, 0.0
      %v876 = vmax.f32 %v835, 0.0
      %v877 = vmax.f32 %v837, 0.0
      %v878 = vmax.f32 %v840, 0.0
      %v879 = vmax.f32 %v842, 0.0
      %s880 = smul.u32 %s24, 16
      %v881 = vstv %s880
      %v882 = vadd.s32 %v881, 2
      %v883 = vadd.s32 %v881, 3
      %v884 = vadd.s32 %v881, 4
      %v885 = vadd.s32 %v881, 5
      %v886 = vadd.s32 %v881, 6
      %v887 = vadd.s32 %v881, 7
      %v888 = vadd.s32 %v881, 8
      %v889 = vadd.s32 %v881, 9
      %v890 = vadd.s32 %v881, 10
      %v891 = vadd.s32 %v881, 11
      %v892 = vadd.s32 %v881, 12
      %v893 = vadd.s32 %v881, 13
      %v894 = vadd.s32 %v881, 14
      %v895 = vadd.s32 %v881, 15
      %v896 = vadd.s32 %v881, 16
      %v897 = vadd.s32 %v881, 17
      %v898 = vsub.s32 %v881, 1
      %v899 = vsub.s32 %v882, 1
      %v900 = vsub.s32 %v883, 1
      %v901 = vsub.s32 %v884, 1
      %v902 = vsub.s32 %v885, 1
      %v903 = vsub.s32 %v886, 1
      %v904 = vsub.s32 %v887, 1
      %v905 = vsub.s32 %v888, 1
      %v906 = vsub.s32 %v889, 1
      %v907 = vsub.s32 %v890, 1
      %v908 = vsub.s32 %v891, 1
      %v909 = vsub.s32 %v892, 1
      %v910 = vsub.s32 %v893, 1
      %v911 = vsub.s32 %v894, 1
      %v912 = vsub.s32 %v895, 1
      %v913 = vsub.s32 %v896, 1
      %v914 = vsub.s32 %v897, 1
      %vm915 = vcmp.lt.s32.totalorder %v898, 0
      %vm916 = vcmp.lt.s32.totalorder %v881, 0
      %vm917 = vcmp.lt.s32.totalorder %v899, 0
      %vm918 = vcmp.lt.s32.totalorder %v900, 0
      %vm919 = vcmp.lt.s32.totalorder %v901, 0
      %vm920 = vcmp.lt.s32.totalorder %v902, 0
      %vm921 = vcmp.lt.s32.totalorder %v903, 0
      %vm922 = vcmp.lt.s32.totalorder %v904, 0
      %vm923 = vcmp.lt.s32.totalorder %v905, 0
      %vm924 = vcmp.lt.s32.totalorder %v906, 0
      %vm925 = vcmp.lt.s32.totalorder %v907, 0
      %vm926 = vcmp.lt.s32.totalorder %v908, 0
      %vm927 = vcmp.lt.s32.totalorder %v909, 0
      %vm928 = vcmp.lt.s32.totalorder %v910, 0
      %vm929 = vcmp.lt.s32.totalorder %v911, 0
      %vm930 = vcmp.lt.s32.totalorder %v912, 0
      %vm931 = vcmp.lt.s32.totalorder %v913, 0
      %vm932 = vcmp.lt.s32.totalorder %v914, 0
      %vm933 = vcmp.ge.s32.totalorder %v898, 16
      %vm934 = vcmp.ge.s32.totalorder %v881, 16
      %vm935 = vcmp.ge.s32.totalorder %v899, 16
      %vm936 = vcmp.ge.s32.totalorder %v900, 16
      %vm937 = vcmp.ge.s32.totalorder %v901, 16
      %vm938 = vcmp.ge.s32.totalorder %v902, 16
      %vm939 = vcmp.ge.s32.totalorder %v903, 16
      %vm940 = vcmp.ge.s32.totalorder %v904, 16
      %vm941 = vcmp.ge.s32.totalorder %v905, 16
      %vm942 = vcmp.ge.s32.totalorder %v906, 16
      %vm943 = vcmp.ge.s32.totalorder %v907, 16
      %vm944 = vcmp.ge.s32.totalorder %v908, 16
      %vm945 = vcmp.ge.s32.totalorder %v909, 16
      %vm946 = vcmp.ge.s32.totalorder %v910, 16
      %vm947 = vcmp.ge.s32.totalorder %v911, 16
      %vm948 = vcmp.ge.s32.totalorder %v912, 16
      %vm949 = vcmp.ge.s32.totalorder %v913, 16
      %vm950 = vcmp.ge.s32.totalorder %v914, 16
      %vm951 = vmor %vm915, %vm933
      %vm952 = vmor %vm916, %vm934
      %vm953 = vmor %vm917, %vm935
      %vm954 = vmor %vm918, %vm936
      %vm955 = vmor %vm919, %vm937
      %vm956 = vmor %vm920, %vm938
      %vm957 = vmor %vm921, %vm939
      %vm958 = vmor %vm922, %vm940
      %vm959 = vmor %vm923, %vm941
      %vm960 = vmor %vm924, %vm942
      %vm961 = vmor %vm925, %vm943
      %vm962 = vmor %vm926, %vm944
      %vm963 = vmor %vm927, %vm945
      %vm964 = vmor %vm928, %vm946
      %vm965 = vmor %vm929, %vm947
      %vm966 = vmor %vm930, %vm948
      %vm967 = vmor %vm931, %vm949
      %vm968 = vmor %vm932, %vm950
      %v969 = vsel %vm951, 1, 0
      %v970 = vsel %vm952, 1, 0
      %v971 = vsel %vm953, 1, 0
      %v972 = vsel %vm954, 1, 0
      %v973 = vsel %vm955, 1, 0
      %v974 = vsel %vm956, 1, 0
      %v975 = vsel %vm957, 1, 0
      %v976 = vsel %vm958, 1, 0
      %v977 = vsel %vm959, 1, 0
      %v978 = vsel %vm960, 1, 0
      %v979 = vsel %vm961, 1, 0
      %v980 = vsel %vm962, 1, 0
      %v981 = vsel %vm963, 1, 0
      %v982 = vsel %vm964, 1, 0
      %v983 = vsel %vm965, 1, 0
      %v984 = vsel %vm966, 1, 0
      %v985 = vsel %vm967, 1, 0
      %v986 = vsel %vm968, 1, 0
      %vm987 = vcmp.eq.s32.totalorder %v969, 1
      %vm988 = vcmp.eq.s32.totalorder %v970, 1
      %vm989 = vcmp.eq.s32.totalorder %v971, 1
      %vm990 = vcmp.eq.s32.totalorder %v972, 1
      %vm991 = vcmp.eq.s32.totalorder %v973, 1
      %vm992 = vcmp.eq.s32.totalorder %v974, 1
      %vm993 = vcmp.eq.s32.totalorder %v975, 1
      %vm994 = vcmp.eq.s32.totalorder %v976, 1
      %vm995 = vcmp.eq.s32.totalorder %v977, 1
      %vm996 = vcmp.eq.s32.totalorder %v978, 1
      %vm997 = vcmp.eq.s32.totalorder %v979, 1
      %vm998 = vcmp.eq.s32.totalorder %v980, 1
      %vm999 = vcmp.eq.s32.totalorder %v981, 1
      %vm1000 = vcmp.eq.s32.totalorder %v982, 1
      %vm1001 = vcmp.eq.s32.totalorder %v983, 1
      %vm1002 = vcmp.eq.s32.totalorder %v984, 1
      %vm1003 = vcmp.eq.s32.totalorder %v985, 1
      %vm1004 = vcmp.eq.s32.totalorder %v986, 1
      %v1005 = vsel %vm987, 0.0, %v844
      %v1006 = vsel %vm987, 0.0, %v845
      %v1007 = vsel %vm988, 0.0, %v846
      %v1008 = vsel %vm988, 0.0, %v847
      %v1009 = vsel %vm989, 0.0, %v848
      %v1010 = vsel %vm989, 0.0, %v849
      %v1011 = vsel %vm990, 0.0, %v850
      %v1012 = vsel %vm990, 0.0, %v851
      %v1013 = vsel %vm991, 0.0, %v852
      %v1014 = vsel %vm991, 0.0, %v853
      %v1015 = vsel %vm992, 0.0, %v854
      %v1016 = vsel %vm992, 0.0, %v855
      %v1017 = vsel %vm993, 0.0, %v856
      %v1018 = vsel %vm993, 0.0, %v857
      %v1019 = vsel %vm994, 0.0, %v858
      %v1020 = vsel %vm994, 0.0, %v859
      %v1021 = vsel %vm995, 0.0, %v860
      %v1022 = vsel %vm995, 0.0, %v861
      %v1023 = vsel %vm996, 0.0, %v862
      %v1024 = vsel %vm996, 0.0, %v863
      %v1025 = vsel %vm997, 0.0, %v864
      %v1026 = vsel %vm997, 0.0, %v865
      %v1027 = vsel %vm998, 0.0, %v866
      %v1028 = vsel %vm998, 0.0, %v867
      %v1029 = vsel %vm999, 0.0, %v868
      %v1030 = vsel %vm999, 0.0, %v869
      %v1031 = vsel %vm1000, 0.0, %v870
      %v1032 = vsel %vm1000, 0.0, %v871
      %v1033 = vsel %vm1001, 0.0, %v872
      %v1034 = vsel %vm1001, 0.0, %v873
      %v1035 = vsel %vm1002, 0.0, %v874
      %v1036 = vsel %vm1002, 0.0, %v875
      %v1037 = vsel %vm1003, 0.0, %v876
      %v1038 = vsel %vm1003, 0.0, %v877
      %v1039 = vsel %vm1004, 0.0, %v878
      %v1040 = vsel %vm1004, 0.0, %v879
      %v1041 = vlaneseq
      %v1042 = vshrl.u32 %v1041, 7
      %v1043 = vadd.s32 %v1042, 8
      %vm1044 = vcmp.eq.s32.totalorder %v1042, 0
      %vm1045 = vcmp.eq.s32.totalorder %v1043, 0
      %v1046 = vrot.slane %v1005, 7
      %v1047 = vrot.slane %v1007, 7
      %v1048 = vrot.slane %v1009, 7
      %v1049 = vrot.slane %v1011, 7
      %v1050 = vrot.slane %v1013, 7
      %v1051 = vrot.slane %v1015, 7
      %v1052 = vrot.slane %v1017, 7
      %v1053 = vrot.slane %v1019, 7
      %v1054 = vrot.slane %v1021, 7
      %v1055 = vrot.slane %v1023, 7
      %v1056 = vrot.slane %v1025, 7
      %v1057 = vrot.slane %v1027, 7
      %v1058 = vrot.slane %v1029, 7
      %v1059 = vrot.slane %v1031, 7
      %v1060 = vrot.slane %v1033, 7
      %v1061 = vrot.slane %v1035, 7
      %v1062 = vrot.slane %v1037, 7
      %v1063 = vrot.slane %v1039, 7
      %v1064 = vrot.slane %v1006, 7
      %v1065 = vrot.slane %v1008, 7
      %v1066 = vrot.slane %v1010, 7
      %v1067 = vrot.slane %v1012, 7
      %v1068 = vrot.slane %v1014, 7
      %v1069 = vrot.slane %v1016, 7
      %v1070 = vrot.slane %v1018, 7
      %v1071 = vrot.slane %v1020, 7
      %v1072 = vrot.slane %v1022, 7
      %v1073 = vrot.slane %v1024, 7
      %v1074 = vrot.slane %v1026, 7
      %v1075 = vrot.slane %v1028, 7
      %v1076 = vrot.slane %v1030, 7
      %v1077 = vrot.slane %v1032, 7
      %v1078 = vrot.slane %v1034, 7
      %v1079 = vrot.slane %v1036, 7
      %v1080 = vrot.slane %v1038, 7
      %v1081 = vrot.slane %v1040, 7
      %vm1082 = vcmp.lt.s32.totalorder %v1042, 1
      %v1083 = vsel %vm1082, %v1046, %v1064
      %v1084 = vsel %vm1082, %v1047, %v1065
      %v1085 = vsel %vm1082, %v1048, %v1066
      %v1086 = vsel %vm1082, %v1049, %v1067
      %v1087 = vsel %vm1082, %v1050, %v1068
      %v1088 = vsel %vm1082, %v1051, %v1069
      %v1089 = vsel %vm1082, %v1052, %v1070
      %v1090 = vsel %vm1082, %v1053, %v1071
      %v1091 = vsel %vm1082, %v1054, %v1072
      %v1092 = vsel %vm1082, %v1055, %v1073
      %v1093 = vsel %vm1082, %v1056, %v1074
      %v1094 = vsel %vm1082, %v1057, %v1075
      %v1095 = vsel %vm1082, %v1058, %v1076
      %v1096 = vsel %vm1082, %v1059, %v1077
      %v1097 = vsel %vm1082, %v1060, %v1078
      %v1098 = vsel %vm1082, %v1061, %v1079
      %v1099 = vsel %vm1082, %v1062, %v1080
      %v1100 = vsel %vm1082, %v1063, %v1081
      %v1101 = vsel %vm1082, %v1064, %v1046
      %v1102 = vsel %vm1082, %v1065, %v1047
      %v1103 = vsel %vm1082, %v1066, %v1048
      %v1104 = vsel %vm1082, %v1067, %v1049
      %v1105 = vsel %vm1082, %v1068, %v1050
      %v1106 = vsel %vm1082, %v1069, %v1051
      %v1107 = vsel %vm1082, %v1070, %v1052
      %v1108 = vsel %vm1082, %v1071, %v1053
      %v1109 = vsel %vm1082, %v1072, %v1054
      %v1110 = vsel %vm1082, %v1073, %v1055
      %v1111 = vsel %vm1082, %v1074, %v1056
      %v1112 = vsel %vm1082, %v1075, %v1057
      %v1113 = vsel %vm1082, %v1076, %v1058
      %v1114 = vsel %vm1082, %v1077, %v1059
      %v1115 = vsel %vm1082, %v1078, %v1060
      %v1116 = vsel %vm1082, %v1079, %v1061
      %v1117 = vsel %vm1082, %v1080, %v1062
      %v1118 = vsel %vm1082, %v1081, %v1063
      %v1119 = vsel %vm1044, 1, 0
      %v1120 = vsel %vm1045, 1, 0
      %vm1121 = vcmp.eq.s32.totalorder %v1119, 1
      %vm1122 = vcmp.eq.s32.totalorder %v1120, 1
      %v1123 = vsel %vm1121, 0.0, %v1101
      %v1124 = vsel %vm1122, 0.0, %v1083
      %v1125 = vsel %vm1121, 0.0, %v1102
      %v1126 = vsel %vm1122, 0.0, %v1084
      %v1127 = vsel %vm1121, 0.0, %v1103
      %v1128 = vsel %vm1122, 0.0, %v1085
      %v1129 = vsel %vm1121, 0.0, %v1104
      %v1130 = vsel %vm1122, 0.0, %v1086
      %v1131 = vsel %vm1121, 0.0, %v1105
      %v1132 = vsel %vm1122, 0.0, %v1087
      %v1133 = vsel %vm1121, 0.0, %v1106
      %v1134 = vsel %vm1122, 0.0, %v1088
      %v1135 = vsel %vm1121, 0.0, %v1107
      %v1136 = vsel %vm1122, 0.0, %v1089
      %v1137 = vsel %vm1121, 0.0, %v1108
      %v1138 = vsel %vm1122, 0.0, %v1090
      %v1139 = vsel %vm1121, 0.0, %v1109
      %v1140 = vsel %vm1122, 0.0, %v1091
      %v1141 = vsel %vm1121, 0.0, %v1110
      %v1142 = vsel %vm1122, 0.0, %v1092
      %v1143 = vsel %vm1121, 0.0, %v1111
      %v1144 = vsel %vm1122, 0.0, %v1093
      %v1145 = vsel %vm1121, 0.0, %v1112
      %v1146 = vsel %vm1122, 0.0, %v1094
      %v1147 = vsel %vm1121, 0.0, %v1113
      %v1148 = vsel %vm1122, 0.0, %v1095
      %v1149 = vsel %vm1121, 0.0, %v1114
      %v1150 = vsel %vm1122, 0.0, %v1096
      %v1151 = vsel %vm1121, 0.0, %v1115
      %v1152 = vsel %vm1122, 0.0, %v1097
      %v1153 = vsel %vm1121, 0.0, %v1116
      %v1154 = vsel %vm1122, 0.0, %v1098
      %v1155 = vsel %vm1121, 0.0, %v1117
      %v1156 = vsel %vm1122, 0.0, %v1099
      %v1157 = vsel %vm1121, 0.0, %v1118
      %v1158 = vsel %vm1122, 0.0, %v1100
      %vm1159 = vcmp.eq.s32.totalorder %v1042, 15
      %vm1160 = vcmp.eq.s32.totalorder %v1043, 15
      %v1161 = vrot.slane %v1005, 1
      %v1162 = vrot.slane %v1007, 1
      %v1163 = vrot.slane %v1009, 1
      %v1164 = vrot.slane %v1011, 1
      %v1165 = vrot.slane %v1013, 1
      %v1166 = vrot.slane %v1015, 1
      %v1167 = vrot.slane %v1017, 1
      %v1168 = vrot.slane %v1019, 1
      %v1169 = vrot.slane %v1021, 1
      %v1170 = vrot.slane %v1023, 1
      %v1171 = vrot.slane %v1025, 1
      %v1172 = vrot.slane %v1027, 1
      %v1173 = vrot.slane %v1029, 1
      %v1174 = vrot.slane %v1031, 1
      %v1175 = vrot.slane %v1033, 1
      %v1176 = vrot.slane %v1035, 1
      %v1177 = vrot.slane %v1037, 1
      %v1178 = vrot.slane %v1039, 1
      %v1179 = vrot.slane %v1006, 1
      %v1180 = vrot.slane %v1008, 1
      %v1181 = vrot.slane %v1010, 1
      %v1182 = vrot.slane %v1012, 1
      %v1183 = vrot.slane %v1014, 1
      %v1184 = vrot.slane %v1016, 1
      %v1185 = vrot.slane %v1018, 1
      %v1186 = vrot.slane %v1020, 1
      %v1187 = vrot.slane %v1022, 1
      %v1188 = vrot.slane %v1024, 1
      %v1189 = vrot.slane %v1026, 1
      %v1190 = vrot.slane %v1028, 1
      %v1191 = vrot.slane %v1030, 1
      %v1192 = vrot.slane %v1032, 1
      %v1193 = vrot.slane %v1034, 1
      %v1194 = vrot.slane %v1036, 1
      %v1195 = vrot.slane %v1038, 1
      %v1196 = vrot.slane %v1040, 1
      %vm1197 = vcmp.lt.s32.totalorder %v1042, 7
      %v1198 = vsel %vm1197, %v1161, %v1179
      %v1199 = vsel %vm1197, %v1162, %v1180
      %v1200 = vsel %vm1197, %v1163, %v1181
      %v1201 = vsel %vm1197, %v1164, %v1182
      %v1202 = vsel %vm1197, %v1165, %v1183
      %v1203 = vsel %vm1197, %v1166, %v1184
      %v1204 = vsel %vm1197, %v1167, %v1185
      %v1205 = vsel %vm1197, %v1168, %v1186
      %v1206 = vsel %vm1197, %v1169, %v1187
      %v1207 = vsel %vm1197, %v1170, %v1188
      %v1208 = vsel %vm1197, %v1171, %v1189
      %v1209 = vsel %vm1197, %v1172, %v1190
      %v1210 = vsel %vm1197, %v1173, %v1191
      %v1211 = vsel %vm1197, %v1174, %v1192
      %v1212 = vsel %vm1197, %v1175, %v1193
      %v1213 = vsel %vm1197, %v1176, %v1194
      %v1214 = vsel %vm1197, %v1177, %v1195
      %v1215 = vsel %vm1197, %v1178, %v1196
      %v1216 = vsel %vm1197, %v1179, %v1161
      %v1217 = vsel %vm1197, %v1180, %v1162
      %v1218 = vsel %vm1197, %v1181, %v1163
      %v1219 = vsel %vm1197, %v1182, %v1164
      %v1220 = vsel %vm1197, %v1183, %v1165
      %v1221 = vsel %vm1197, %v1184, %v1166
      %v1222 = vsel %vm1197, %v1185, %v1167
      %v1223 = vsel %vm1197, %v1186, %v1168
      %v1224 = vsel %vm1197, %v1187, %v1169
      %v1225 = vsel %vm1197, %v1188, %v1170
      %v1226 = vsel %vm1197, %v1189, %v1171
      %v1227 = vsel %vm1197, %v1190, %v1172
      %v1228 = vsel %vm1197, %v1191, %v1173
      %v1229 = vsel %vm1197, %v1192, %v1174
      %v1230 = vsel %vm1197, %v1193, %v1175
      %v1231 = vsel %vm1197, %v1194, %v1176
      %v1232 = vsel %vm1197, %v1195, %v1177
      %v1233 = vsel %vm1197, %v1196, %v1178
      %v1234 = vsel %vm1159, 1, 0
      %v1235 = vsel %vm1160, 1, 0
      %vm1236 = vcmp.eq.s32.totalorder %v1234, 1
      %vm1237 = vcmp.eq.s32.totalorder %v1235, 1
      %v1238 = vsel %vm1236, 0.0, %v1198
      %v1239 = vsel %vm1237, 0.0, %v1216
      %v1240 = vsel %vm1236, 0.0, %v1199
      %v1241 = vsel %vm1237, 0.0, %v1217
      %v1242 = vsel %vm1236, 0.0, %v1200
      %v1243 = vsel %vm1237, 0.0, %v1218
      %v1244 = vsel %vm1236, 0.0, %v1201
      %v1245 = vsel %vm1237, 0.0, %v1219
      %v1246 = vsel %vm1236, 0.0, %v1202
      %v1247 = vsel %vm1237, 0.0, %v1220
      %v1248 = vsel %vm1236, 0.0, %v1203
      %v1249 = vsel %vm1237, 0.0, %v1221
      %v1250 = vsel %vm1236, 0.0, %v1204
      %v1251 = vsel %vm1237, 0.0, %v1222
      %v1252 = vsel %vm1236, 0.0, %v1205
      %v1253 = vsel %vm1237, 0.0, %v1223
      %v1254 = vsel %vm1236, 0.0, %v1206
      %v1255 = vsel %vm1237, 0.0, %v1224
      %v1256 = vsel %vm1236, 0.0, %v1207
      %v1257 = vsel %vm1237, 0.0, %v1225
      %v1258 = vsel %vm1236, 0.0, %v1208
      %v1259 = vsel %vm1237, 0.0, %v1226
      %v1260 = vsel %vm1236, 0.0, %v1209
      %v1261 = vsel %vm1237, 0.0, %v1227
      %v1262 = vsel %vm1236, 0.0, %v1210
      %v1263 = vsel %vm1237, 0.0, %v1228
      %v1264 = vsel %vm1236, 0.0, %v1211
      %v1265 = vsel %vm1237, 0.0, %v1229
      %v1266 = vsel %vm1236, 0.0, %v1212
      %v1267 = vsel %vm1237, 0.0, %v1230
      %v1268 = vsel %vm1236, 0.0, %v1213
      %v1269 = vsel %vm1237, 0.0, %v1231
      %v1270 = vsel %vm1236, 0.0, %v1214
      %v1271 = vsel %vm1237, 0.0, %v1232
      %v1272 = vsel %vm1236, 0.0, %v1215
      %v1273 = vsel %vm1237, 0.0, %v1233
      %1310 = vrot.lane.b32.xlu0 %v1005, 32
      %v1311 = vpop.permute.xlu0 %1310
      %1312 = vrot.lane.b32.xlu0 %v1006, 32
      %v1313 = vpop.permute.xlu0 %1312
      %1314 = vrot.lane.b32.xlu0 %v1007, 32
      %v1315 = vpop.permute.xlu0 %1314
      %1316 = vrot.lane.b32.xlu0 %v1008, 32
      %v1317 = vpop.permute.xlu0 %1316
      %1318 = vrot.lane.b32.xlu0 %v1009, 32
      %v1319 = vpop.permute.xlu0 %1318
      %1320 = vrot.lane.b32.xlu0 %v1010, 32
      %v1321 = vpop.permute.xlu0 %1320
      %1322 = vrot.lane.b32.xlu0 %v1011, 32
      %v1323 = vpop.permute.xlu0 %1322
      %1324 = vrot.lane.b32.xlu0 %v1012, 32
      %v1325 = vpop.permute.xlu0 %1324
      %1326 = vrot.lane.b32.xlu0 %v1013, 32
      %v1327 = vpop.permute.xlu0 %1326
      %1328 = vrot.lane.b32.xlu0 %v1014, 32
      %v1329 = vpop.permute.xlu0 %1328
      %1330 = vrot.lane.b32.xlu0 %v1015, 32
      %v1331 = vpop.permute.xlu0 %1330
      %1332 = vrot.lane.b32.xlu0 %v1016, 32
      %v1333 = vpop.permute.xlu0 %1332
      %1334 = vrot.lane.b32.xlu0 %v1017, 32
      %v1335 = vpop.permute.xlu0 %1334
      %1336 = vrot.lane.b32.xlu0 %v1018, 32
      %v1337 = vpop.permute.xlu0 %1336
      %1338 = vrot.lane.b32.xlu0 %v1019, 32
      %v1339 = vpop.permute.xlu0 %1338
      %1340 = vrot.lane.b32.xlu0 %v1020, 32
      %v1341 = vpop.permute.xlu0 %1340
      %1342 = vrot.lane.b32.xlu0 %v1021, 32
      %v1343 = vpop.permute.xlu0 %1342
      %1344 = vrot.lane.b32.xlu0 %v1022, 32
      %v1345 = vpop.permute.xlu0 %1344
      %1346 = vrot.lane.b32.xlu0 %v1023, 32
      %v1347 = vpop.permute.xlu0 %1346
      %1348 = vrot.lane.b32.xlu0 %v1024, 32
      %v1349 = vpop.permute.xlu0 %1348
      %1350 = vrot.lane.b32.xlu0 %v1025, 32
      %v1351 = vpop.permute.xlu0 %1350
      %1352 = vrot.lane.b32.xlu0 %v1026, 32
      %v1353 = vpop.permute.xlu0 %1352
      %1354 = vrot.lane.b32.xlu0 %v1027, 32
      %v1355 = vpop.permute.xlu0 %1354
      %1356 = vrot.lane.b32.xlu0 %v1028, 32
      %v1357 = vpop.permute.xlu0 %1356
      %1358 = vrot.lane.b32.xlu0 %v1029, 32
      %v1359 = vpop.permute.xlu0 %1358
      %1360 = vrot.lane.b32.xlu0 %v1030, 32
      %v1361 = vpop.permute.xlu0 %1360
      %1362 = vrot.lane.b32.xlu0 %v1031, 32
      %v1363 = vpop.permute.xlu0 %1362
      %1364 = vrot.lane.b32.xlu0 %v1032, 32
      %v1365 = vpop.permute.xlu0 %1364
      %1366 = vrot.lane.b32.xlu0 %v1033, 32
      %v1367 = vpop.permute.xlu0 %1366
      %1368 = vrot.lane.b32.xlu0 %v1034, 32
      %v1369 = vpop.permute.xlu0 %1368
      %1370 = vrot.lane.b32.xlu0 %v1035, 32
      %v1371 = vpop.permute.xlu0 %1370
      %1372 = vrot.lane.b32.xlu0 %v1036, 32
      %v1373 = vpop.permute.xlu0 %1372
      %1374 = vrot.lane.b32.xlu0 %v1037, 32
      %v1375 = vpop.permute.xlu0 %1374
      %1376 = vrot.lane.b32.xlu0 %v1038, 32
      %v1377 = vpop.permute.xlu0 %1376
      %1378 = vrot.lane.b32.xlu0 %v1039, 32
      %v1379 = vpop.permute.xlu0 %1378
      %1380 = vrot.lane.b32.xlu0 %v1040, 32
      %v1381 = vpop.permute.xlu0 %1380
      %1454 = vrot.lane.b32.xlu0 %v1238, 64
      %v1455 = vpop.permute.xlu0 %1454
      %1456 = vrot.lane.b32.xlu0 %v1239, 64
      %v1457 = vpop.permute.xlu0 %1456
      %1458 = vrot.lane.b32.xlu0 %v1240, 64
      %v1459 = vpop.permute.xlu0 %1458
      %1460 = vrot.lane.b32.xlu0 %v1241, 64
      %v1461 = vpop.permute.xlu0 %1460
      %1462 = vrot.lane.b32.xlu0 %v1242, 64
      %v1463 = vpop.permute.xlu0 %1462
      %1464 = vrot.lane.b32.xlu0 %v1243, 64
      %v1465 = vpop.permute.xlu0 %1464
      %1466 = vrot.lane.b32.xlu0 %v1244, 64
      %v1467 = vpop.permute.xlu0 %1466
      %1468 = vrot.lane.b32.xlu0 %v1245, 64
      %v1469 = vpop.permute.xlu0 %1468
      %1470 = vrot.lane.b32.xlu0 %v1246, 64
      %v1471 = vpop.permute.xlu0 %1470
      %1472 = vrot.lane.b32.xlu0 %v1247, 64
      %v1473 = vpop.permute.xlu0 %1472
      %1474 = vrot.lane.b32.xlu0 %v1248, 64
      %v1475 = vpop.permute.xlu0 %1474
      %1476 = vrot.lane.b32.xlu0 %v1249, 64
      %v1477 = vpop.permute.xlu0 %1476
      %1478 = vrot.lane.b32.xlu0 %v1250, 64
      %v1479 = vpop.permute.xlu0 %1478
      %1480 = vrot.lane.b32.xlu0 %v1251, 64
      %v1481 = vpop.permute.xlu0 %1480
      %1482 = vrot.lane.b32.xlu0 %v1252, 64
      %v1483 = vpop.permute.xlu0 %1482
      %1484 = vrot.lane.b32.xlu0 %v1253, 64
      %v1485 = vpop.permute.xlu0 %1484
      %1486 = vrot.lane.b32.xlu0 %v1254, 64
      %v1487 = vpop.permute.xlu0 %1486
      %1488 = vrot.lane.b32.xlu0 %v1255, 64
      %v1489 = vpop.permute.xlu0 %1488
      %1490 = vrot.lane.b32.xlu0 %v1256, 64
      %v1491 = vpop.permute.xlu0 %1490
      %1492 = vrot.lane.b32.xlu0 %v1257, 64
      %v1493 = vpop.permute.xlu0 %1492
      %1494 = vrot.lane.b32.xlu0 %v1258, 64
      %v1495 = vpop.permute.xlu0 %1494
      %1496 = vrot.lane.b32.xlu0 %v1259, 64
      %v1497 = vpop.permute.xlu0 %1496
      %1498 = vrot.lane.b32.xlu0 %v1260, 64
      %v1499 = vpop.permute.xlu0 %1498
      %1500 = vrot.lane.b32.xlu0 %v1261, 64
      %v1501 = vpop.permute.xlu0 %1500
      %1502 = vrot.lane.b32.xlu0 %v1262, 64
      %v1503 = vpop.permute.xlu0 %1502
      %1504 = vrot.lane.b32.xlu0 %v1263, 64
      %v1505 = vpop.permute.xlu0 %1504
      %1506 = vrot.lane.b32.xlu0 %v1264, 64
      %v1507 = vpop.permute.xlu0 %1506
      %1508 = vrot.lane.b32.xlu0 %v1265, 64
      %v1509 = vpop.permute.xlu0 %1508
      %1510 = vrot.lane.b32.xlu0 %v1266, 64
      %v1511 = vpop.permute.xlu0 %1510
      %1512 = vrot.lane.b32.xlu0 %v1267, 64
      %v1513 = vpop.permute.xlu0 %1512
      %1514 = vrot.lane.b32.xlu0 %v1268, 64
      %v1515 = vpop.permute.xlu0 %1514
      %1516 = vrot.lane.b32.xlu0 %v1269, 64
      %v1517 = vpop.permute.xlu0 %1516
      %1518 = vrot.lane.b32.xlu0 %v1270, 64
      %v1519 = vpop.permute.xlu0 %1518
      %1520 = vrot.lane.b32.xlu0 %v1271, 64
      %v1521 = vpop.permute.xlu0 %1520
      %1522 = vrot.lane.b32.xlu0 %v1272, 64
      %v1523 = vpop.permute.xlu0 %1522
      %1524 = vrot.lane.b32.xlu0 %v1273, 64
      %v1525 = vpop.permute.xlu0 %1524
      %vm1562 = vcmask 261120
      %v1563 = vsel %vm1562, %v1123, %v1311
      %v1564 = vsel %vm1562, %v1124, %v1313
      %v1565 = vsel %vm1562, %v1125, %v1315
      %v1566 = vsel %vm1562, %v1126, %v1317
      %v1567 = vsel %vm1562, %v1127, %v1319
      %v1568 = vsel %vm1562, %v1128, %v1321
      %v1569 = vsel %vm1562, %v1129, %v1323
      %v1570 = vsel %vm1562, %v1130, %v1325
      %v1571 = vsel %vm1562, %v1131, %v1327
      %v1572 = vsel %vm1562, %v1132, %v1329
      %v1573 = vsel %vm1562, %v1133, %v1331
      %v1574 = vsel %vm1562, %v1134, %v1333
      %v1575 = vsel %vm1562, %v1135, %v1335
      %v1576 = vsel %vm1562, %v1136, %v1337
      %v1577 = vsel %vm1562, %v1137, %v1339
      %v1578 = vsel %vm1562, %v1138, %v1341
      %v1579 = vsel %vm1562, %v1139, %v1343
      %v1580 = vsel %vm1562, %v1140, %v1345
      %v1581 = vsel %vm1562, %v1141, %v1347
      %v1582 = vsel %vm1562, %v1142, %v1349
      %v1583 = vsel %vm1562, %v1143, %v1351
      %v1584 = vsel %vm1562, %v1144, %v1353
      %v1585 = vsel %vm1562, %v1145, %v1355
      %v1586 = vsel %vm1562, %v1146, %v1357
      %v1587 = vsel %vm1562, %v1147, %v1359
      %v1588 = vsel %vm1562, %v1148, %v1361
      %v1589 = vsel %vm1562, %v1149, %v1363
      %v1590 = vsel %vm1562, %v1150, %v1365
      %v1591 = vsel %vm1562, %v1151, %v1367
      %v1592 = vsel %vm1562, %v1152, %v1369
      %v1593 = vsel %vm1562, %v1153, %v1371
      %v1594 = vsel %vm1562, %v1154, %v1373
      %v1595 = vsel %vm1562, %v1155, %v1375
      %v1596 = vsel %vm1562, %v1156, %v1377
      %v1597 = vsel %vm1562, %v1157, %v1379
      %v1598 = vsel %vm1562, %v1158, %v1381
      %vm1599 = vcmask 523264
      %v1600 = vsel %vm1599, %v1563, %v1455
      %v1601 = vsel %vm1599, %v1564, %v1457
      %v1602 = vsel %vm1599, %v1565, %v1459
      %v1603 = vsel %vm1599, %v1566, %v1461
      %v1604 = vsel %vm1599, %v1567, %v1463
      %v1605 = vsel %vm1599, %v1568, %v1465
      %v1606 = vsel %vm1599, %v1569, %v1467
      %v1607 = vsel %vm1599, %v1570, %v1469
      %v1608 = vsel %vm1599, %v1571, %v1471
      %v1609 = vsel %vm1599, %v1572, %v1473
      %v1610 = vsel %vm1599, %v1573, %v1475
      %v1611 = vsel %vm1599, %v1574, %v1477
      %v1612 = vsel %vm1599, %v1575, %v1479
      %v1613 = vsel %vm1599, %v1576, %v1481
      %v1614 = vsel %vm1599, %v1577, %v1483
      %v1615 = vsel %vm1599, %v1578, %v1485
      %v1616 = vsel %vm1599, %v1579, %v1487
      %v1617 = vsel %vm1599, %v1580, %v1489
      %v1618 = vsel %vm1599, %v1581, %v1491
      %v1619 = vsel %vm1599, %v1582, %v1493
      %v1620 = vsel %vm1599, %v1583, %v1495
      %v1621 = vsel %vm1599, %v1584, %v1497
      %v1622 = vsel %vm1599, %v1585, %v1499
      %v1623 = vsel %vm1599, %v1586, %v1501
      %v1624 = vsel %vm1599, %v1587, %v1503
      %v1625 = vsel %vm1599, %v1588, %v1505
      %v1626 = vsel %vm1599, %v1589, %v1507
      %v1627 = vsel %vm1599, %v1590, %v1509
      %v1628 = vsel %vm1599, %v1591, %v1511
      %v1629 = vsel %vm1599, %v1592, %v1513
      %v1630 = vsel %vm1599, %v1593, %v1515
      %v1631 = vsel %vm1599, %v1594, %v1517
      %v1632 = vsel %vm1599, %v1595, %v1519
      %v1633 = vsel %vm1599, %v1596, %v1521
      %v1634 = vsel %vm1599, %v1597, %v1523
      %v1635 = vsel %vm1599, %v1598, %v1525
      %v1636 = vpack.c.bf16 %v1600, %v1600
      %v1637 = vpack.c.bf16 %v1601, %v1601
      %v1638 = vpack.c.bf16 %v1602, %v1602
      %v1639 = vpack.c.bf16 %v1603, %v1603
      %v1640 = vpack.c.bf16 %v1604, %v1604
      %v1641 = vpack.c.bf16 %v1605, %v1605
      %v1642 = vpack.c.bf16 %v1606, %v1606
      %v1643 = vpack.c.bf16 %v1607, %v1607
      %v1644 = vpack.c.bf16 %v1608, %v1608
      %v1645 = vpack.c.bf16 %v1609, %v1609
      %v1646 = vpack.c.bf16 %v1610, %v1610
      %v1647 = vpack.c.bf16 %v1611, %v1611
      %v1648 = vpack.c.bf16 %v1612, %v1612
      %v1649 = vpack.c.bf16 %v1613, %v1613
      %v1650 = vpack.c.bf16 %v1614, %v1614
      %v1651 = vpack.c.bf16 %v1615, %v1615
      %v1652 = vpack.c.bf16 %v1616, %v1616
      %v1653 = vpack.c.bf16 %v1617, %v1617
      %v1654 = vpack.c.bf16 %v1618, %v1618
      %v1655 = vpack.c.bf16 %v1619, %v1619
      %v1656 = vpack.c.bf16 %v1620, %v1620
      %v1657 = vpack.c.bf16 %v1621, %v1621
      %v1658 = vpack.c.bf16 %v1622, %v1622
      %v1659 = vpack.c.bf16 %v1623, %v1623
      %v1660 = vpack.c.bf16 %v1624, %v1624
      %v1661 = vpack.c.bf16 %v1625, %v1625
      %v1662 = vpack.c.bf16 %v1626, %v1626
      %v1663 = vpack.c.bf16 %v1627, %v1627
      %v1664 = vpack.c.bf16 %v1628, %v1628
      %v1665 = vpack.c.bf16 %v1629, %v1629
      %v1666 = vpack.c.bf16 %v1630, %v1630
      %v1667 = vpack.c.bf16 %v1631, %v1631
      %v1668 = vpack.c.bf16 %v1632, %v1632
      %v1669 = vpack.c.bf16 %v1633, %v1633
      %v1670 = vpack.c.bf16 %v1634, %v1634
      %v1671 = vpack.c.bf16 %v1635, %v1635
      %v1672 = vld [vmem:[%s7] sm:$0xf]
      %v1673 = vld [vmem:[%s7 + $0x4] sm:$0xf]
      %v1674 = vld [vmem:[%s7 + $0x8] sm:$0xf]
      %v1675 = vld [vmem:[%s7 + $0xc] sm:$0xf]
      %v1676 = vld [vmem:[%s7 + $0x10] sm:$0xf]
      %v1677 = vld [vmem:[%s7 + $0x14] sm:$0xf]
      %v1678 = vld [vmem:[%s7 + $0x18] sm:$0xf]
      %v1679 = vld [vmem:[%s7 + $0x1c] sm:$0xf]
      %v1680 = vld [vmem:[%s7 + $0x20] sm:$0xf]
      %v1681 = vld [vmem:[%s7 + $0x24] sm:$0xf]
      %v1682 = vld [vmem:[%s7 + $0x28] sm:$0xf]
      %v1683 = vld [vmem:[%s7 + $0x2c] sm:$0xf]
      %s1684 = scalar_lea.vmem %s7, 48
      %v1685 = vld [vmem:[%s1684] sm:$0xf]
      %v1686 = vld [vmem:[%s1684 + $0x4] sm:$0xf]
      %v1687 = vld [vmem:[%s1684 + $0x8] sm:$0xf]
      %v1688 = vld [vmem:[%s1684 + $0xc] sm:$0xf]
      %v1689 = vld [vmem:[%s1684 + $0x10] sm:$0xf]
      %v1690 = vld [vmem:[%s1684 + $0x14] sm:$0xf]
      %v1691 = vld [vmem:[%s1684 + $0x18] sm:$0xf]
      %v1692 = vld [vmem:[%s1684 + $0x1c] sm:$0xf]
      %v1693 = vld [vmem:[%s1684 + $0x20] sm:$0xf]
      %v1694 = vld [vmem:[%s1684 + $0x24] sm:$0xf]
      %v1695 = vld [vmem:[%s1684 + $0x28] sm:$0xf]
      %v1696 = vld [vmem:[%s1684 + $0x2c] sm:$0xf]
      %v1729 = vunpack.c.l.b16 %v1638
      %v1730 = vunpack.c.l.b16 %v1639
      %v1731 = vunpack.c.l.b16 %v1640
      %v1732 = vunpack.c.l.b16 %v1641
      %v1733 = vunpack.c.l.b16 %v1642
      %v1734 = vunpack.c.l.b16 %v1643
      %v1735 = vunpack.c.l.b16 %v1644
      %v1736 = vunpack.c.l.b16 %v1645
      %v1737 = vunpack.c.l.b16 %v1646
      %v1738 = vunpack.c.l.b16 %v1647
      %v1739 = vunpack.c.l.b16 %v1648
      %v1740 = vunpack.c.l.b16 %v1649
      %v1741 = vunpack.c.l.b16 %v1650
      %v1742 = vunpack.c.l.b16 %v1651
      %v1743 = vunpack.c.l.b16 %v1652
      %v1744 = vunpack.c.l.b16 %v1653
      %v1745 = vunpack.c.l.b16 %v1654
      %v1746 = vunpack.c.l.b16 %v1655
      %v1747 = vunpack.c.l.b16 %v1656
      %v1748 = vunpack.c.l.b16 %v1657
      %v1749 = vunpack.c.l.b16 %v1658
      %v1750 = vunpack.c.l.b16 %v1659
      %v1751 = vunpack.c.l.b16 %v1660
      %v1752 = vunpack.c.l.b16 %v1661
      %v1753 = vunpack.c.l.b16 %v1662
      %v1754 = vunpack.c.l.b16 %v1663
      %v1755 = vunpack.c.l.b16 %v1664
      %v1756 = vunpack.c.l.b16 %v1665
      %v1757 = vunpack.c.l.b16 %v1666
      %v1758 = vunpack.c.l.b16 %v1667
      %v1759 = vunpack.c.l.b16 %v1668
      %v1760 = vunpack.c.l.b16 %v1669
      %v1761 = vpack.c.b16 %v1730, %v1729
      %v1762 = vpack.c.b16 %v1732, %v1731
      %v1763 = vpack.c.b16 %v1734, %v1733
      %v1764 = vpack.c.b16 %v1736, %v1735
      %v1765 = vpack.c.b16 %v1738, %v1737
      %v1766 = vpack.c.b16 %v1740, %v1739
      %v1767 = vpack.c.b16 %v1742, %v1741
      %v1768 = vpack.c.b16 %v1744, %v1743
      %v1769 = vpack.c.b16 %v1746, %v1745
      %v1770 = vpack.c.b16 %v1748, %v1747
      %v1771 = vpack.c.b16 %v1750, %v1749
      %v1772 = vpack.c.b16 %v1752, %v1751
      %v1773 = vpack.c.b16 %v1754, %v1753
      %v1774 = vpack.c.b16 %v1756, %v1755
      %v1775 = vpack.c.b16 %v1758, %v1757
      %v1776 = vpack.c.b16 %v1760, %v1759
      %v1789 = vunpack.c.l.b16 %v1685
      %v1790 = vunpack.c.l.b16 %v1686
      %v1791 = vunpack.c.l.b16 %v1687
      %v1792 = vunpack.c.l.b16 %v1688
      %v1793 = vunpack.c.l.b16 %v1689
      %v1794 = vunpack.c.l.b16 %v1690
      %v1795 = vunpack.c.l.b16 %v1691
      %v1796 = vunpack.c.l.b16 %v1692
      %v1797 = vunpack.c.l.b16 %v1693
      %v1798 = vunpack.c.l.b16 %v1694
      %v1799 = vunpack.c.l.b16 %v1695
      %v1800 = vunpack.c.l.b16 %v1696
      %v1801 = vpack.c.b16 %v1790, %v1789
      %v1802 = vpack.c.b16 %v1792, %v1791
      %v1803 = vpack.c.b16 %v1794, %v1793
      %v1804 = vpack.c.b16 %v1796, %v1795
      %v1805 = vpack.c.b16 %v1798, %v1797
      %v1806 = vpack.c.b16 %v1800, %v1799
      %vm1813 = vcmask 785408
      %v1815 = vsel %vm1813, %v1761, 0
      %v1818 = vsel %vm1813, %v1762, 0
      %v1821 = vsel %vm1813, %v1763, 0
      %v1824 = vsel %vm1813, %v1764, 0
      %v1827 = vsel %vm1813, %v1765, 0
      %v1830 = vsel %vm1813, %v1766, 0
      %v1833 = vsel %vm1813, %v1767, 0
      %v1836 = vsel %vm1813, %v1768, 0
      %v1839 = vsel %vm1813, %v1769, 0
      %v1842 = vsel %vm1813, %v1770, 0
      %v1845 = vsel %vm1813, %v1771, 0
      %v1848 = vsel %vm1813, %v1772, 0
      %v1851 = vsel %vm1813, %v1773, 0
      %v1854 = vsel %vm1813, %v1774, 0
      %v1857 = vsel %vm1813, %v1775, 0
      %v1860 = vsel %vm1813, %v1776, 0
      %1862 = vmatpush.bf16.msra.mxu0 0
      %1863 = vmatpush.bf16.msra.mxu0 0
      %1864 = vmatpush.bf16.msra.mxu0 %v1806
      %1865 = vmatpush.bf16.msra.mxu0 %v1805
      %1866 = vmatpush.bf16.msra.mxu0 %v1804
      %1867 = vmatpush.bf16.msra.mxu0 %v1803
      %1868 = vmatpush.bf16.msra.mxu0 %v1802
      %1869 = vmatpush.bf16.msra.mxu0 %v1801
      %1870 = vmatmul.bf16.gmra.mxu0 %v1815
      %v1871 = vpop.f32.mrf.mxu0
      %v1872 = vadd.f32 0.0, %v1871
      %v1873 = vpop.f32.mrf.mxu0
      %v1874 = vadd.f32 0.0, %v1873
      %1875 = vmatmul.bf16.gmra.mxu0 %v1818
      %v1876 = vpop.f32.mrf.mxu0
      %v1877 = vadd.f32 0.0, %v1876
      %v1878 = vpop.f32.mrf.mxu0
      %v1879 = vadd.f32 0.0, %v1878
      %1880 = vmatmul.bf16.gmra.mxu0 %v1821
      %v1881 = vpop.f32.mrf.mxu0
      %v1882 = vadd.f32 0.0, %v1881
      %v1883 = vpop.f32.mrf.mxu0
      %v1884 = vadd.f32 0.0, %v1883
      %1885 = vmatmul.bf16.gmra.mxu0 %v1824
      %v1886 = vpop.f32.mrf.mxu0
      %v1887 = vadd.f32 0.0, %v1886
      %v1888 = vpop.f32.mrf.mxu0
      %v1889 = vadd.f32 0.0, %v1888
      %1890 = vmatmul.bf16.gmra.mxu0 %v1827
      %v1891 = vpop.f32.mrf.mxu0
      %v1892 = vadd.f32 0.0, %v1891
      %v1893 = vpop.f32.mrf.mxu0
      %v1894 = vadd.f32 0.0, %v1893
      %1895 = vmatmul.bf16.gmra.mxu0 %v1830
      %v1896 = vpop.f32.mrf.mxu0
      %v1897 = vadd.f32 0.0, %v1896
      %v1898 = vpop.f32.mrf.mxu0
      %v1899 = vadd.f32 0.0, %v1898
      %1900 = vmatmul.bf16.gmra.mxu0 %v1833
      %v1901 = vpop.f32.mrf.mxu0
      %v1902 = vadd.f32 0.0, %v1901
      %v1903 = vpop.f32.mrf.mxu0
      %v1904 = vadd.f32 0.0, %v1903
      %1905 = vmatmul.bf16.gmra.mxu0 %v1836
      %v1906 = vpop.f32.mrf.mxu0
      %v1907 = vadd.f32 0.0, %v1906
      %v1908 = vpop.f32.mrf.mxu0
      %v1909 = vadd.f32 0.0, %v1908
      %1910 = vmatmul.bf16.gmra.mxu0 %v1839
      %v1911 = vpop.f32.mrf.mxu0
      %v1912 = vadd.f32 0.0, %v1911
      %v1913 = vpop.f32.mrf.mxu0
      %v1914 = vadd.f32 0.0, %v1913
      %1915 = vmatmul.bf16.gmra.mxu0 %v1842
      %v1916 = vpop.f32.mrf.mxu0
      %v1917 = vadd.f32 0.0, %v1916
      %v1918 = vpop.f32.mrf.mxu0
      %v1919 = vadd.f32 0.0, %v1918
      %1920 = vmatmul.bf16.gmra.mxu0 %v1845
      %v1921 = vpop.f32.mrf.mxu0
      %v1922 = vadd.f32 0.0, %v1921
      %v1923 = vpop.f32.mrf.mxu0
      %v1924 = vadd.f32 0.0, %v1923
      %1925 = vmatmul.bf16.gmra.mxu0 %v1848
      %v1926 = vpop.f32.mrf.mxu0
      %v1927 = vadd.f32 0.0, %v1926
      %v1928 = vpop.f32.mrf.mxu0
      %v1929 = vadd.f32 0.0, %v1928
      %1930 = vmatmul.bf16.gmra.mxu0 %v1851
      %v1931 = vpop.f32.mrf.mxu0
      %v1932 = vadd.f32 0.0, %v1931
      %v1933 = vpop.f32.mrf.mxu0
      %v1934 = vadd.f32 0.0, %v1933
      %1935 = vmatmul.bf16.gmra.mxu0 %v1854
      %v1936 = vpop.f32.mrf.mxu0
      %v1937 = vadd.f32 0.0, %v1936
      %v1938 = vpop.f32.mrf.mxu0
      %v1939 = vadd.f32 0.0, %v1938
      %1940 = vmatmul.bf16.gmra.mxu0 %v1857
      %v1941 = vpop.f32.mrf.mxu0
      %v1942 = vadd.f32 0.0, %v1941
      %v1943 = vpop.f32.mrf.mxu0
      %v1944 = vadd.f32 0.0, %v1943
      %1945 = vmatmul.bf16.gmra.mxu0 %v1860
      %v1946 = vpop.f32.mrf.mxu0
      %v1947 = vadd.f32 0.0, %v1946
      %v1948 = vpop.f32.mrf.mxu0
      %v1949 = vadd.f32 0.0, %v1948
      %1950 = vdwg.mxu0
      %v1953 = vunpack.c.l.b16 %v1636
      %v1954 = vunpack.c.l.b16 %v1637
      %v1955 = vpack.c.b16 %v1954, %v1953
      %v1968 = vunpack.c.l.b16 %v1672
      %v1969 = vunpack.c.l.b16 %v1673
      %v1970 = vunpack.c.l.b16 %v1674
      %v1971 = vunpack.c.l.b16 %v1675
      %v1972 = vunpack.c.l.b16 %v1676
      %v1973 = vunpack.c.l.b16 %v1677
      %v1974 = vunpack.c.l.b16 %v1678
      %v1975 = vunpack.c.l.b16 %v1679
      %v1976 = vunpack.c.l.b16 %v1680
      %v1977 = vunpack.c.l.b16 %v1681
      %v1978 = vunpack.c.l.b16 %v1682
      %v1979 = vunpack.c.l.b16 %v1683
      %v1980 = vpack.c.b16 %v1969, %v1968
      %v1981 = vpack.c.b16 %v1971, %v1970
      %v1982 = vpack.c.b16 %v1973, %v1972
      %v1983 = vpack.c.b16 %v1975, %v1974
      %v1984 = vpack.c.b16 %v1977, %v1976
      %v1985 = vpack.c.b16 %v1979, %v1978
      %v1993 = vsel %vm1813, %v1955, 0
      %1995 = vmatpush.bf16.msra.mxu0 0
      %1996 = vmatpush.bf16.msra.mxu0 0
      %1997 = vmatpush.bf16.msra.mxu0 %v1985
      %1998 = vmatpush.bf16.msra.mxu0 %v1984
      %1999 = vmatpush.bf16.msra.mxu0 %v1983
      %2000 = vmatpush.bf16.msra.mxu0 %v1982
      %2001 = vmatpush.bf16.msra.mxu0 %v1981
      %2002 = vmatpush.bf16.msra.mxu0 %v1980
      %2003 = vmatmul.bf16.gmra.mxu0 %v1993
      %v2004 = vpop.f32.mrf.mxu0
      %v2005 = vadd.f32 %v1872, %v2004
      %v2006 = vpop.f32.mrf.mxu0
      %v2007 = vadd.f32 %v1874, %v2006
      %2008 = vmatmul.bf16.gmra.mxu0 %v1815
      %v2009 = vpop.f32.mrf.mxu0
      %v2010 = vadd.f32 %v1877, %v2009
      %v2011 = vpop.f32.mrf.mxu0
      %v2012 = vadd.f32 %v1879, %v2011
      %2013 = vmatmul.bf16.gmra.mxu0 %v1818
      %v2014 = vpop.f32.mrf.mxu0
      %v2015 = vadd.f32 %v1882, %v2014
      %v2016 = vpop.f32.mrf.mxu0
      %v2017 = vadd.f32 %v1884, %v2016
      %2018 = vmatmul.bf16.gmra.mxu0 %v1821
      %v2019 = vpop.f32.mrf.mxu0
      %v2020 = vadd.f32 %v1887, %v2019
      %v2021 = vpop.f32.mrf.mxu0
      %v2022 = vadd.f32 %v1889, %v2021
      %2023 = vmatmul.bf16.gmra.mxu0 %v1824
      %v2024 = vpop.f32.mrf.mxu0
      %v2025 = vadd.f32 %v1892, %v2024
      %v2026 = vpop.f32.mrf.mxu0
      %v2027 = vadd.f32 %v1894, %v2026
      %2028 = vmatmul.bf16.gmra.mxu0 %v1827
      %v2029 = vpop.f32.mrf.mxu0
      %v2030 = vadd.f32 %v1897, %v2029
      %v2031 = vpop.f32.mrf.mxu0
      %v2032 = vadd.f32 %v1899, %v2031
      %2033 = vmatmul.bf16.gmra.mxu0 %v1830
      %v2034 = vpop.f32.mrf.mxu0
      %v2035 = vadd.f32 %v1902, %v2034
      %v2036 = vpop.f32.mrf.mxu0
      %v2037 = vadd.f32 %v1904, %v2036
      %2038 = vmatmul.bf16.gmra.mxu0 %v1833
      %v2039 = vpop.f32.mrf.mxu0
      %v2040 = vadd.f32 %v1907, %v2039
      %v2041 = vpop.f32.mrf.mxu0
      %v2042 = vadd.f32 %v1909, %v2041
      %2043 = vmatmul.bf16.gmra.mxu0 %v1836
      %v2044 = vpop.f32.mrf.mxu0
      %v2045 = vadd.f32 %v1912, %v2044
      %v2046 = vpop.f32.mrf.mxu0
      %v2047 = vadd.f32 %v1914, %v2046
      %2048 = vmatmul.bf16.gmra.mxu0 %v1839
      %v2049 = vpop.f32.mrf.mxu0
      %v2050 = vadd.f32 %v1917, %v2049
      %v2051 = vpop.f32.mrf.mxu0
      %v2052 = vadd.f32 %v1919, %v2051
      %2053 = vmatmul.bf16.gmra.mxu0 %v1842
      %v2054 = vpop.f32.mrf.mxu0
      %v2055 = vadd.f32 %v1922, %v2054
      %v2056 = vpop.f32.mrf.mxu0
      %v2057 = vadd.f32 %v1924, %v2056
      %2058 = vmatmul.bf16.gmra.mxu0 %v1845
      %v2059 = vpop.f32.mrf.mxu0
      %v2060 = vadd.f32 %v1927, %v2059
      %v2061 = vpop.f32.mrf.mxu0
      %v2062 = vadd.f32 %v1929, %v2061
      %2063 = vmatmul.bf16.gmra.mxu0 %v1848
      %v2064 = vpop.f32.mrf.mxu0
      %v2065 = vadd.f32 %v1932, %v2064
      %v2066 = vpop.f32.mrf.mxu0
      %v2067 = vadd.f32 %v1934, %v2066
      %2068 = vmatmul.bf16.gmra.mxu0 %v1851
      %v2069 = vpop.f32.mrf.mxu0
      %v2070 = vadd.f32 %v1937, %v2069
      %v2071 = vpop.f32.mrf.mxu0
      %v2072 = vadd.f32 %v1939, %v2071
      %2073 = vmatmul.bf16.gmra.mxu0 %v1854
      %v2074 = vpop.f32.mrf.mxu0
      %v2075 = vadd.f32 %v1942, %v2074
      %v2076 = vpop.f32.mrf.mxu0
      %v2077 = vadd.f32 %v1944, %v2076
      %2078 = vmatmul.bf16.gmra.mxu0 %v1857
      %v2079 = vpop.f32.mrf.mxu0
      %v2080 = vadd.f32 %v1947, %v2079
      %v2081 = vpop.f32.mrf.mxu0
      %v2082 = vadd.f32 %v1949, %v2081
      %2083 = vdwg.mxu0
      %s2084 = scalar_lea.vmem %s7, 96
      %v2085 = vld [vmem:[%s2084] sm:$0xf]
      %v2086 = vld [vmem:[%s2084 + $0x4] sm:$0xf]
      %v2087 = vld [vmem:[%s2084 + $0x8] sm:$0xf]
      %v2088 = vld [vmem:[%s2084 + $0xc] sm:$0xf]
      %v2089 = vld [vmem:[%s2084 + $0x10] sm:$0xf]
      %v2090 = vld [vmem:[%s2084 + $0x14] sm:$0xf]
      %v2091 = vld [vmem:[%s2084 + $0x18] sm:$0xf]
      %v2092 = vld [vmem:[%s2084 + $0x1c] sm:$0xf]
      %v2093 = vld [vmem:[%s2084 + $0x20] sm:$0xf]
      %v2094 = vld [vmem:[%s2084 + $0x24] sm:$0xf]
      %v2095 = vld [vmem:[%s2084 + $0x28] sm:$0xf]
      %v2096 = vld [vmem:[%s2084 + $0x2c] sm:$0xf]
      %v2099 = vunpack.c.l.b16 %v1670
      %v2100 = vunpack.c.l.b16 %v1671
      %v2101 = vpack.c.b16 %v2100, %v2099
      %v2114 = vunpack.c.l.b16 %v2085
      %v2115 = vunpack.c.l.b16 %v2086
      %v2116 = vunpack.c.l.b16 %v2087
      %v2117 = vunpack.c.l.b16 %v2088
      %v2118 = vunpack.c.l.b16 %v2089
      %v2119 = vunpack.c.l.b16 %v2090
      %v2120 = vunpack.c.l.b16 %v2091
      %v2121 = vunpack.c.l.b16 %v2092
      %v2122 = vunpack.c.l.b16 %v2093
      %v2123 = vunpack.c.l.b16 %v2094
      %v2124 = vunpack.c.l.b16 %v2095
      %v2125 = vunpack.c.l.b16 %v2096
      %v2126 = vpack.c.b16 %v2115, %v2114
      %v2127 = vpack.c.b16 %v2117, %v2116
      %v2128 = vpack.c.b16 %v2119, %v2118
      %v2129 = vpack.c.b16 %v2121, %v2120
      %v2130 = vpack.c.b16 %v2123, %v2122
      %v2131 = vpack.c.b16 %v2125, %v2124
      %v2139 = vsel %vm1813, %v2101, 0
      %2141 = vmatpush.bf16.msra.mxu0 0
      %2142 = vmatpush.bf16.msra.mxu0 0
      %2143 = vmatpush.bf16.msra.mxu0 %v2131
      %2144 = vmatpush.bf16.msra.mxu0 %v2130
      %2145 = vmatpush.bf16.msra.mxu0 %v2129
      %2146 = vmatpush.bf16.msra.mxu0 %v2128
      %2147 = vmatpush.bf16.msra.mxu0 %v2127
      %2148 = vmatpush.bf16.msra.mxu0 %v2126
      %2149 = vmatmul.bf16.gmra.mxu0 %v1818
      %v2150 = vpop.f32.mrf.mxu0
      %v2151 = vadd.f32 0.0, %v2150
      %v2152 = vpop.f32.mrf.mxu0
      %v2153 = vadd.f32 0.0, %v2152
      %2154 = vmatmul.bf16.gmra.mxu0 %v1821
      %v2155 = vpop.f32.mrf.mxu0
      %v2156 = vadd.f32 0.0, %v2155
      %v2157 = vpop.f32.mrf.mxu0
      %v2158 = vadd.f32 0.0, %v2157
      %2159 = vmatmul.bf16.gmra.mxu0 %v1824
      %v2160 = vpop.f32.mrf.mxu0
      %v2161 = vadd.f32 0.0, %v2160
      %v2162 = vpop.f32.mrf.mxu0
      %v2163 = vadd.f32 0.0, %v2162
      %2164 = vmatmul.bf16.gmra.mxu0 %v1827
      %v2165 = vpop.f32.mrf.mxu0
      %v2166 = vadd.f32 0.0, %v2165
      %v2167 = vpop.f32.mrf.mxu0
      %v2168 = vadd.f32 0.0, %v2167
      %2169 = vmatmul.bf16.gmra.mxu0 %v1830
      %v2170 = vpop.f32.mrf.mxu0
      %v2171 = vadd.f32 0.0, %v2170
      %v2172 = vpop.f32.mrf.mxu0
      %v2173 = vadd.f32 0.0, %v2172
      %2174 = vmatmul.bf16.gmra.mxu0 %v1833
      %v2175 = vpop.f32.mrf.mxu0
      %v2176 = vadd.f32 0.0, %v2175
      %v2177 = vpop.f32.mrf.mxu0
      %v2178 = vadd.f32 0.0, %v2177
      %2179 = vmatmul.bf16.gmra.mxu0 %v1836
      %v2180 = vpop.f32.mrf.mxu0
      %v2181 = vadd.f32 0.0, %v2180
      %v2182 = vpop.f32.mrf.mxu0
      %v2183 = vadd.f32 0.0, %v2182
      %2184 = vmatmul.bf16.gmra.mxu0 %v1839
      %v2185 = vpop.f32.mrf.mxu0
      %v2186 = vadd.f32 0.0, %v2185
      %v2187 = vpop.f32.mrf.mxu0
      %v2188 = vadd.f32 0.0, %v2187
      %2189 = vmatmul.bf16.gmra.mxu0 %v1842
      %v2190 = vpop.f32.mrf.mxu0
      %v2191 = vadd.f32 0.0, %v2190
      %v2192 = vpop.f32.mrf.mxu0
      %v2193 = vadd.f32 0.0, %v2192
      %2194 = vmatmul.bf16.gmra.mxu0 %v1845
      %v2195 = vpop.f32.mrf.mxu0
      %v2196 = vadd.f32 0.0, %v2195
      %v2197 = vpop.f32.mrf.mxu0
      %v2198 = vadd.f32 0.0, %v2197
      %2199 = vmatmul.bf16.gmra.mxu0 %v1848
      %v2200 = vpop.f32.mrf.mxu0
      %v2201 = vadd.f32 0.0, %v2200
      %v2202 = vpop.f32.mrf.mxu0
      %v2203 = vadd.f32 0.0, %v2202
      %2204 = vmatmul.bf16.gmra.mxu0 %v1851
      %v2205 = vpop.f32.mrf.mxu0
      %v2206 = vadd.f32 0.0, %v2205
      %v2207 = vpop.f32.mrf.mxu0
      %v2208 = vadd.f32 0.0, %v2207
      %2209 = vmatmul.bf16.gmra.mxu0 %v1854
      %v2210 = vpop.f32.mrf.mxu0
      %v2211 = vadd.f32 0.0, %v2210
      %v2212 = vpop.f32.mrf.mxu0
      %v2213 = vadd.f32 0.0, %v2212
      %2214 = vmatmul.bf16.gmra.mxu0 %v1857
      %v2215 = vpop.f32.mrf.mxu0
      %v2216 = vadd.f32 0.0, %v2215
      %v2217 = vpop.f32.mrf.mxu0
      %v2218 = vadd.f32 0.0, %v2217
      %2219 = vmatmul.bf16.gmra.mxu0 %v1860
      %v2220 = vpop.f32.mrf.mxu0
      %v2221 = vadd.f32 0.0, %v2220
      %v2222 = vpop.f32.mrf.mxu0
      %v2223 = vadd.f32 0.0, %v2222
      %2224 = vmatmul.bf16.gmra.mxu0 %v2139
      %v2225 = vpop.f32.mrf.mxu0
      %v2226 = vadd.f32 0.0, %v2225
      %v2227 = vpop.f32.mrf.mxu0
      %v2228 = vadd.f32 0.0, %v2227
      %2229 = vdwg.mxu0
      %v2230 = vadd.f32 %v2005, %v2151
      %v2231 = vadd.f32 %v2007, %v2153
      %v2232 = vadd.f32 %v2010, %v2156
      %v2233 = vadd.f32 %v2012, %v2158
      %v2234 = vadd.f32 %v2015, %v2161
      %v2235 = vadd.f32 %v2017, %v2163
      %v2236 = vadd.f32 %v2020, %v2166
      %v2237 = vadd.f32 %v2022, %v2168
      %v2238 = vadd.f32 %v2025, %v2171
      %v2239 = vadd.f32 %v2027, %v2173
      %v2240 = vadd.f32 %v2030, %v2176
      %v2241 = vadd.f32 %v2032, %v2178
      %v2242 = vadd.f32 %v2035, %v2181
      %v2243 = vadd.f32 %v2037, %v2183
      %v2244 = vadd.f32 %v2040, %v2186
      %v2245 = vadd.f32 %v2042, %v2188
      %v2246 = vadd.f32 %v2045, %v2191
      %v2247 = vadd.f32 %v2047, %v2193
      %v2248 = vadd.f32 %v2050, %v2196
      %v2249 = vadd.f32 %v2052, %v2198
      %v2250 = vadd.f32 %v2055, %v2201
      %v2251 = vadd.f32 %v2057, %v2203
      %v2252 = vadd.f32 %v2060, %v2206
      %v2253 = vadd.f32 %v2062, %v2208
      %v2254 = vadd.f32 %v2065, %v2211
      %v2255 = vadd.f32 %v2067, %v2213
      %v2256 = vadd.f32 %v2070, %v2216
      %v2257 = vadd.f32 %v2072, %v2218
      %v2258 = vadd.f32 %v2075, %v2221
      %v2259 = vadd.f32 %v2077, %v2223
      %v2260 = vadd.f32 %v2080, %v2226
      %v2261 = vadd.f32 %v2082, %v2228
      %v2262 = vpack.c.bf16 %v2230, %v2230
      %v2263 = vpack.c.bf16 %v2231, %v2231
      %v2264 = vpack.c.bf16 %v2232, %v2232
      %v2265 = vpack.c.bf16 %v2233, %v2233
      %v2266 = vpack.c.bf16 %v2234, %v2234
      %v2267 = vpack.c.bf16 %v2235, %v2235
      %v2268 = vpack.c.bf16 %v2236, %v2236
      %v2269 = vpack.c.bf16 %v2237, %v2237
      %v2270 = vpack.c.bf16 %v2238, %v2238
      %v2271 = vpack.c.bf16 %v2239, %v2239
      %v2272 = vpack.c.bf16 %v2240, %v2240
      %v2273 = vpack.c.bf16 %v2241, %v2241
      %v2274 = vpack.c.bf16 %v2242, %v2242
      %v2275 = vpack.c.bf16 %v2243, %v2243
      %v2276 = vpack.c.bf16 %v2244, %v2244
      %v2277 = vpack.c.bf16 %v2245, %v2245
      %v2278 = vpack.c.bf16 %v2246, %v2246
      %v2279 = vpack.c.bf16 %v2247, %v2247
      %v2280 = vpack.c.bf16 %v2248, %v2248
      %v2281 = vpack.c.bf16 %v2249, %v2249
      %v2282 = vpack.c.bf16 %v2250, %v2250
      %v2283 = vpack.c.bf16 %v2251, %v2251
      %v2284 = vpack.c.bf16 %v2252, %v2252
      %v2285 = vpack.c.bf16 %v2253, %v2253
      %v2286 = vpack.c.bf16 %v2254, %v2254
      %v2287 = vpack.c.bf16 %v2255, %v2255
      %v2288 = vpack.c.bf16 %v2256, %v2256
      %v2289 = vpack.c.bf16 %v2257, %v2257
      %v2290 = vpack.c.bf16 %v2258, %v2258
      %v2291 = vpack.c.bf16 %v2259, %v2259
      %v2292 = vpack.c.bf16 %v2260, %v2260
      %v2293 = vpack.c.bf16 %v2261, %v2261
      %vm2294 = vcmask 60416
      %2295 = vst.msk [vmem:[%s472] sm:$0xf] %vm2294, %v2262
      %2296 = vst.msk [vmem:[%s472 + $0x4] sm:$0xf] %vm2294, %v2263
      %2297 = vst.msk [vmem:[%s472 + $0x8] sm:$0xf] %vm2294, %v2264
      %2298 = vst.msk [vmem:[%s472 + $0xc] sm:$0xf] %vm2294, %v2265
      %2299 = vst.msk [vmem:[%s472 + $0x10] sm:$0xf] %vm2294, %v2266
      %2300 = vst.msk [vmem:[%s472 + $0x14] sm:$0xf] %vm2294, %v2267
      %2301 = vst.msk [vmem:[%s472 + $0x18] sm:$0xf] %vm2294, %v2268
      %2302 = vst.msk [vmem:[%s472 + $0x1c] sm:$0xf] %vm2294, %v2269
      %2303 = vst.msk [vmem:[%s472 + $0x20] sm:$0xf] %vm2294, %v2270
      %2304 = vst.msk [vmem:[%s472 + $0x24] sm:$0xf] %vm2294, %v2271
      %2305 = vst.msk [vmem:[%s472 + $0x28] sm:$0xf] %vm2294, %v2272
      %2306 = vst.msk [vmem:[%s472 + $0x2c] sm:$0xf] %vm2294, %v2273
      %2307 = vst.msk [vmem:[%s472 + $0x30] sm:$0xf] %vm2294, %v2274
      %2308 = vst.msk [vmem:[%s472 + $0x34] sm:$0xf] %vm2294, %v2275
      %2309 = vst.msk [vmem:[%s472 + $0x38] sm:$0xf] %vm2294, %v2276
      %2310 = vst.msk [vmem:[%s472 + $0x3c] sm:$0xf] %vm2294, %v2277
      %2311 = vst.msk [vmem:[%s472 + $0x40] sm:$0xf] %vm2294, %v2278
      %2312 = vst.msk [vmem:[%s472 + $0x44] sm:$0xf] %vm2294, %v2279
      %2313 = vst.msk [vmem:[%s472 + $0x48] sm:$0xf] %vm2294, %v2280
      %2314 = vst.msk [vmem:[%s472 + $0x4c] sm:$0xf] %vm2294, %v2281
      %2315 = vst.msk [vmem:[%s472 + $0x50] sm:$0xf] %vm2294, %v2282
      %2316 = vst.msk [vmem:[%s472 + $0x54] sm:$0xf] %vm2294, %v2283
      %2317 = vst.msk [vmem:[%s472 + $0x58] sm:$0xf] %vm2294, %v2284
      %2318 = vst.msk [vmem:[%s472 + $0x5c] sm:$0xf] %vm2294, %v2285
      %2319 = vst.msk [vmem:[%s472 + $0x60] sm:$0xf] %vm2294, %v2286
      %2320 = vst.msk [vmem:[%s472 + $0x64] sm:$0xf] %vm2294, %v2287
      %2321 = vst.msk [vmem:[%s472 + $0x68] sm:$0xf] %vm2294, %v2288
      %2322 = vst.msk [vmem:[%s472 + $0x6c] sm:$0xf] %vm2294, %v2289
      %2323 = vst.msk [vmem:[%s472 + $0x70] sm:$0xf] %vm2294, %v2290
      %2324 = vst.msk [vmem:[%s472 + $0x74] sm:$0xf] %vm2294, %v2291
      %2325 = vst.msk [vmem:[%s472 + $0x78] sm:$0xf] %vm2294, %v2292
      %2326 = vst.msk [vmem:[%s472 + $0x7c] sm:$0xf] %vm2294, %v2293
      %s2327 = smul.u32 16, %s24
      %p2328 = scmp.lt.s32.totalorder %s23, 1
      %s2329 = scalar_select %p2328, %s23, 1
      %p2330 = scmp.lt.s32.totalorder %s2327, 15
      %s2331 = scalar_select %p2330, %s2327, 15
      %s2332 = smul.addr %s2331, 2
      %s2333 = smul.addr %s2329, 32
      %s2334 = sadd.s32 %s2332, %s2333
      %s2335 = smul.addr %s2334, 4
      %s2336 = scalar_lea.vmem %s8, %s2335
      // Predicated region
      $region53: #{dense_layer_forward.1} parent=51 // pred_check
        %p2337 = pneg %p256
      $region54: #{dense_layer_forward.1} parent=51 // pred_check_branch
        %2339 = sbr.rel (%p2337) target = $region56
      $region55: #{dense_layer_forward.1} parent=51 // pred_region
        %s2340 = smul.u32 16, %s24
      $region56: #{dense_layer_forward.1} parent=51 // pred_fallthru
        _
    $region52: #{dense_layer_forward.1} parent=5 // pred_fallthru
      _
    %p2341 = scmp.le.s32.totalorder 2, %s14
    // Predicated region
    $region57: #{dense_layer_forward.1} parent=5 // pred_check
      %p2342 = pneg %p2341
    $region58: #{dense_layer_forward.1} parent=5 // pred_check_branch
      %2344 = sbr.rel (%p2342) target = $region60
    $region59: #{dense_layer_forward.1} parent=5 // pred_region
      %s2345 = ssub.s32 %s14, 2
      // Predicated region
      $region61: #{dense_layer_forward.1} parent=59 // pred_check
        %p2346 = pneg %p262
      $region62: #{dense_layer_forward.1} parent=59 // pred_check_branch
        %2348 = sbr.rel (%p2346) target = $region64
      $region63: #{dense_layer_forward.1} parent=59 // pred_region
        %s2349 = smul.u32 16, %s26
        %p2350 = scmp.lt.s32.totalorder %s25, 1
        %s2351 = scalar_select %p2350, %s25, 1
        %p2352 = scmp.lt.s32.totalorder %s2349, 15
        %s2353 = scalar_select %p2352, %s2349, 15
        %s2354 = smul.addr %s2353, 2
        %s2355 = smul.addr %s2351, 32
        %s2356 = sadd.s32 %s2354, %s2355
        %s2357 = smul.addr %s2356, 4
        %s2358 = scalar_lea.vmem %s8, %s2357
      $region64: #{dense_layer_forward.1} parent=59 // pred_fallthru
        _
    $region60: #{dense_layer_forward.1} parent=5 // pred_fallthru
      _
  $region6: #{dense_layer_forward.1} parent=0 // loop_footer
    %s18 = sadd.s32 1, %s14
  $region7: #{dense_layer_forward.1} parent=0 // loop_footer_branch
    %13 = sbr.rel target = $region3
  $region8: #{dense_layer_forward.1} parent=0 // loop_exit
    _

</llo_original>
